<compile_context>
chip_gen: v5e
topology: v5e:2x2
jax: 0.10.0
libtpu: 0.0.40
codegen_flags: <defaults>
</compile_context>

<pallas_src>
import functools

import jax
import jax.numpy as jnp
from jax.experimental import pallas as pl
from jax.experimental.pallas import tpu as pltpu

BN_EPS = 1e-5


# ------------------------------ Pallas kernel ------------------------------- #

def _policy_net_kernel(x_ref, w_ref, scale_ref, shift_ref, pw_ref, pb_ref,
                       fcw_ref, fcb_ref, out_ref,
                       act_ref, col_ref, res_ref,
                       *, N, H, W, C, num_steps):
  """One grid step == one 3x3 conv of the tower (+ policy head at the last step).

  act_ref : (N, H+2, W+2, C) f32  zero-padded activation, resident across steps
  col_ref : (N*H*W, 9*C)     bf16 im2col LHS rebuilt every step
  res_ref : (N*H*W, C)       f32  residual (block input), resident across steps
  """
  t = pl.program_id(0)
  NHW = N * H * W
  HW = H * W

  # step 0: zero the padded activation scratch and load the input interior.
  @pl.when(t == 0)
  def _init():
    act_ref[...] = jnp.zeros_like(act_ref)
    act_ref[:, 1:H + 1, 1:W + 1, :] = x_ref[...]
    res_ref[...] = jnp.zeros_like(res_ref)   # keeps the residual gate NaN-safe

  # im2col: 9 shifted windows side by side -> one wide-K bf16 LHS.
  for k in range(9):
    ky, kx = divmod(k, 3)
    col_ref[:, k * C:(k + 1) * C] = (
        act_ref[:, ky:ky + H, kx:kx + W, :]
        .reshape(NHW, C).astype(col_ref.dtype))

  # single MXU matmul (K = 9*C), f32 accumulation, folded BN/bias affine in f32.
  y = jnp.dot(col_ref[...], w_ref[0], preferred_element_type=jnp.float32)
  y = y * scale_ref[0] + shift_ref[0]

  # second conv of a residual block (t even, >= 2): add the saved residual.
  gate = jnp.logical_and(t >= 2, t % 2 == 0).astype(jnp.float32)
  y = y + gate * res_ref[...]
  y = jnp.maximum(y, 0.0)

  # this step's output is the input of the next residual block: stash it.
  @pl.when(jnp.logical_and(t % 2 == 0, t < num_steps - 1))
  def _save_residual():
    res_ref[...] = y

  # write back into the interior of the padded activation for the next conv.
  act_ref[:, 1:H + 1, 1:W + 1, :] = y.reshape(N, H, W, C)

  # last step: fused 1x1 policy conv + ReLU + NCHW flatten + policy FC.
  @pl.when(t == num_steps - 1)
  def _policy_head():
    pol = jnp.dot(y, pw_ref[...], preferred_element_type=jnp.float32) + pb_ref[...]
    pol = jnp.maximum(pol, 0.0)                       # (NHW, 2)
    # logits[n, j] = sum_{s,c} pol[n*HW + s, c] * fc_w[c*HW + s, j]
    # (fcw_ref is fc_w pre-split to (2, HW, HW)); implemented with
    # lane-broadcast multiplies + a sublane reduction to avoid any in-kernel
    # transpose/relayout.  N is tiny, so the static unroll is fine.
    rows = []
    for n in range(N):
      pn0 = pol[n * HW:(n + 1) * HW, 0:1]             # (HW, 1)
      pn1 = pol[n * HW:(n + 1) * HW, 1:2]             # (HW, 1)
      contrib = pn0 * fcw_ref[0] + pn1 * fcw_ref[1]   # (HW, HW)
      rows.append(jnp.sum(contrib, axis=0, keepdims=True))
    logits = jnp.concatenate(rows, axis=0) + fcb_ref[...]
    out_ref[...] = logits.astype(out_ref.dtype)       # single lane-dense store


# ------------------------------ forward wrapper ------------------------------ #

def policy_net_forward(params, x_nchw, *, board_size):
  """Fused Pallas implementation.  x_nchw: (N, Cin, B, B) -> logits (N, B*B)."""
  N, Cin, H, W = x_nchw.shape
  assert H == board_size and W == board_size
  C = params["conv1_w"].shape[-1]
  assert Cin <= C
  HW = H * W
  nb = len(params["blocks"])
  num_steps = 1 + 2 * nb

  # NCHW -> NHWC, channel-pad the network input once so every step sees C chans.
  x = jnp.transpose(x_nchw, (0, 2, 3, 1)).astype(jnp.float32)
  if Cin < C:
    x = jnp.pad(x, ((0, 0), (0, 0), (0, 0), (0, C - Cin)))

  # Stack per-step (9*C, C) weights and folded BN scale/shift along a leading
  # "conv step" axis that the kernel grid streams over (bf16 weights).
  w0 = jnp.zeros((3, 3, C, C), jnp.float32).at[:, :, :Cin, :].set(
      params["conv1_w"].astype(jnp.float32))
  w_list = [w0.reshape(9 * C, C)]
  scale_list = [jnp.ones((C,), jnp.float32)]
  shift_list = [params["conv1_b"].astype(jnp.float32)]
  for blk in params["blocks"]:
    s1 = blk["bn1_gamma"] * jax.lax.rsqrt(blk["bn1_var"] + BN_EPS)
    w_list.append(blk["conv1_w"].reshape(9 * C, C))
    scale_list.append(s1)
    shift_list.append(blk["bn1_beta"] + (blk["conv1_b"] - blk["bn1_mean"]) * s1)
    s2 = blk["bn2_gamma"] * jax.lax.rsqrt(blk["bn2_var"] + BN_EPS)
    w_list.append(blk["conv2_w"].reshape(9 * C, C))
    scale_list.append(s2)
    shift_list.append(blk["bn2_beta"] + (blk["conv2_b"] - blk["bn2_mean"]) * s2)

  w_all = jnp.stack(w_list).astype(jnp.bfloat16)                    # (S, 9C, C)
  scale_all = jnp.stack(scale_list).reshape(num_steps, 1, C).astype(jnp.float32)
  shift_all = jnp.stack(shift_list).reshape(num_steps, 1, C).astype(jnp.float32)

  pw = params["policy_w"].astype(jnp.float32)                       # (C, 2)
  pb = params["policy_b"].reshape(1, 2).astype(jnp.float32)
  fcw = params["fc_w"].reshape(2, HW, HW).astype(jnp.float32)       # split by channel
  fcb = params["fc_b"].reshape(1, HW).astype(jnp.float32)

  kernel = functools.partial(_policy_net_kernel, N=N, H=H, W=W, C=C,
                             num_steps=num_steps)
  return pl.pallas_call(
      kernel,
      out_shape=jax.ShapeDtypeStruct((N, HW), jnp.float32),
      grid=(num_steps,),
      in_specs=[
          pl.BlockSpec((N, H, W, C), lambda t: (0, 0, 0, 0)),   # input (fetched once)
          pl.BlockSpec((1, 9 * C, C), lambda t: (t, 0, 0)),     # streamed conv weights
          pl.BlockSpec((1, 1, C), lambda t: (t, 0, 0)),         # streamed BN scale
          pl.BlockSpec((1, 1, C), lambda t: (t, 0, 0)),         # streamed BN shift
          pl.BlockSpec((C, 2), lambda t: (0, 0)),               # policy conv W
          pl.BlockSpec((1, 2), lambda t: (0, 0)),               # policy conv b
          pl.BlockSpec((2, HW, HW), lambda t: (0, 0, 0)),       # fc W (NCHW-flatten split)
          pl.BlockSpec((1, HW), lambda t: (0, 0)),              # fc b
      ],
      out_specs=pl.BlockSpec((N, HW), lambda t: (0, 0)),
      scratch_shapes=[
          pltpu.VMEM((N, H + 2, W + 2, C), jnp.float32),   # zero-padded activation
          pltpu.VMEM((N * H * W, 9 * C), jnp.bfloat16),    # im2col LHS
          pltpu.VMEM((N * H * W, C), jnp.float32),         # residual
      ],
      compiler_params=pltpu.CompilerParams(
          dimension_semantics=("arbitrary",),               # sequential tower
          vmem_limit_bytes=32 * 1024 * 1024),
  )(x, w_all, scale_all, shift_all, pw, pb, fcw, fcb)


# -------------------------------- parameters --------------------------------- #

def init_params(key, board_size, input_channels, num_filters, num_res_blocks):
  keys = jax.random.split(key, num_res_blocks + 6)

  def conv_w(k, cin, cout):
    return 0.05 * jax.random.normal(k, (3, 3, cin, cout), jnp.float32)  # HWIO

  params = {
      "conv1_w": conv_w(keys[0], input_channels, num_filters),
      "conv1_b": 0.05 * jax.random.normal(keys[1], (num_filters,), jnp.float32),
      # 1x1 policy conv stored as (Cin, 2) channel matmul.
      "policy_w": 0.05 * jax.random.normal(keys[2], (num_filters, 2), jnp.float32),
      "policy_b": 0.05 * jax.random.normal(keys[3], (2,), jnp.float32),
      # Linear(2*B*B -> B*B); stored transposed as (in, out).
      "fc_w": 0.05 * jax.random.normal(
          keys[4], (2 * board_size * board_size, board_size * board_size),
          jnp.float32),
      "fc_b": 0.05 * jax.random.normal(
          keys[5], (board_size * board_size,), jnp.float32),
  }

  blocks = []
  for i in range(num_res_blocks):
    ks = jax.random.split(keys[6 + i], 12)
    blocks.append(dict(
        conv1_w=conv_w(ks[0], num_filters, num_filters),
        conv1_b=0.05 * jax.random.normal(ks[1], (num_filters,), jnp.float32),
        conv2_w=conv_w(ks[2], num_filters, num_filters),
        conv2_b=0.05 * jax.random.normal(ks[3], (num_filters,), jnp.float32),
        bn1_gamma=1.0 + 0.1 * jax.random.normal(ks[4], (num_filters,), jnp.float32),
        bn1_beta=0.1 * jax.random.normal(ks[5], (num_filters,), jnp.float32),
        bn1_mean=0.1 * jax.random.normal(ks[6], (num_filters,), jnp.float32),
        bn1_var=1.0 + 0.1 * jax.random.uniform(ks[7], (num_filters,), jnp.float32),
        bn2_gamma=1.0 + 0.1 * jax.random.normal(ks[8], (num_filters,), jnp.float32),
        bn2_beta=0.1 * jax.random.normal(ks[9], (num_filters,), jnp.float32),
        bn2_mean=0.1 * jax.random.normal(ks[10], (num_filters,), jnp.float32),
        bn2_var=1.0 + 0.1 * jax.random.uniform(ks[11], (num_filters,), jnp.float32),
    ))
  params["blocks"] = blocks
  return params


# --------------------------------- reference --------------------------------- #

def reference_forward(params, x_nchw, board_size, conv_dtype=jnp.float32):
  """Pure-JAX reference.

  conv_dtype=float32 reproduces the exact (eval-mode) PyTorch module math;
  conv_dtype=bfloat16 mirrors the kernel's MXU input precision (bf16 conv
  operands, f32 accumulation, f32 epilogue) for a tighter numerical check.
  """
  def conv3x3(x, w_hwio, b):
    y = jax.lax.conv_general_dilated(
        x.astype(conv_dtype), w_hwio.astype(conv_dtype), (1, 1), "SAME",
        dimension_numbers=("NCHW", "HWIO", "NCHW"),
        preferred_element_type=jnp.float32)
    return y + b.reshape(1, -1, 1, 1)

  def bn(x, g, beta, m, v):
    s = g * jax.lax.rsqrt(v + BN_EPS)
    return (x - m.reshape(1, -1, 1, 1)) * s.reshape(1, -1, 1, 1) + beta.reshape(1, -1, 1, 1)

  x = jax.nn.relu(conv3x3(x_nchw.astype(jnp.float32),
                          params["conv1_w"], params["conv1_b"]))
  for blk in params["blocks"]:
    r = x
    h = jax.nn.relu(bn(conv3x3(x, blk["conv1_w"], blk["conv1_b"]),
                       blk["bn1_gamma"], blk["bn1_beta"],
                       blk["bn1_mean"], blk["bn1_var"]))
    h = bn(conv3x3(h, blk["conv2_w"], blk["conv2_b"]),
           blk["bn2_gamma"], blk["bn2_beta"], blk["bn2_mean"], blk["bn2_var"])
    x = jax.nn.relu(h + r)

  # 1x1 policy conv + ReLU (f32, like the kernel), NCHW flatten, FC.
  N = x.shape[0]
  p = jnp.einsum("nchw,cd->ndhw", x, params["policy_w"],
                 precision=jax.lax.Precision.HIGHEST)
  p = jax.nn.relu(p + params["policy_b"].reshape(1, 2, 1, 1))
  p = p.reshape(N, -1)                                 # matches torch.flatten on NCHW
  return jnp.dot(p, params["fc_w"],
                 precision=jax.lax.Precision.HIGHEST) + params["fc_b"]


# ------------------------------------ main ------------------------------------ #

if __name__ == "__main__":
  board_size = 8
  input_channels = 4       # N history planes + 3 (small synthetic config)
  num_filters = 32         # scaled down from 256 for a small example
  num_res_blocks = 10      # matches the module
  batch = 2

  key = jax.random.PRNGKey(0)
  pkey, xkey = jax.random.split(key)
  params = init_params(pkey, board_size, input_channels, num_filters,
                       num_res_blocks)
  x = jax.random.normal(xkey, (batch, input_channels, board_size, board_size),
                        jnp.float32)

  fwd = jax.jit(functools.partial(policy_net_forward, board_size=board_size))
  out = jax.block_until_ready(fwd(params, x))
  assert out.shape == (batch, board_size * board_size)

  # Check against a reference that mirrors the kernel's bf16-MXU / f32-
  # accumulation numerics (validates im2col, BN fold, residual, flatten, FC).
  ref_matched = reference_forward(params, x, board_size, conv_dtype=jnp.bfloat16)
  err_m = float(jnp.max(jnp.abs(out - ref_matched)))
  assert jnp.allclose(out, ref_matched, rtol=2e-2, atol=2e-2), (
      f"max abs err vs bf16-matched reference: {err_m}")

  # Loose check against the exact f32 module semantics (difference is only the
  # deliberate bf16 MXU-input precision trade).
  ref_f32 = reference_forward(params, x, board_size, conv_dtype=jnp.float32)
  err_f = float(jnp.max(jnp.abs(out - ref_f32)))
  assert jnp.allclose(out, ref_f32, rtol=2e-1, atol=2e-1), (
      f"max abs err vs f32 reference: {err_f}")

  print("KERNEL_OK")
</pallas_src>

<mosaic_0001>
module attributes {stable_mosaic.version = 11 : i64} {
  func.func @_policy_net_kernel(%arg0: i32, %arg1: memref<2x8x8x32xf32, #tpu.memory_space<vmem>>, %arg2: memref<1x288x32xbf16, #tpu.memory_space<vmem>>, %arg3: memref<1x1x32xf32, #tpu.memory_space<vmem>>, %arg4: memref<1x1x32xf32, #tpu.memory_space<vmem>>, %arg5: memref<32x2xf32, #tpu.memory_space<vmem>>, %arg6: memref<1x2xf32, #tpu.memory_space<vmem>>, %arg7: memref<2x64x64xf32, #tpu.memory_space<vmem>>, %arg8: memref<1x64xf32, #tpu.memory_space<vmem>>, %arg9: memref<2x64xf32, #tpu.memory_space<vmem>>, %arg10: memref<2x10x10x32xf32, #tpu.memory_space<vmem>>, %arg11: memref<128x288xbf16, #tpu.memory_space<vmem>>, %arg12: memref<128x32xf32, #tpu.memory_space<vmem>>) attributes {dimension_semantics = [#tpu.dimension_semantics<arbitrary>], iteration_bounds = array<i64: 21>, scalar_prefetch = 0 : i64, scratch_operands = 3 : i64, tpu.core_type = #tpu.core_type<tc>, window_params = [{pipeline_mode = #tpu.pipeline_mode<synchronous>, transform_indices = @transform_0, window_bounds = array<i64: 2, 8, 8, 32>}, {transform_indices = @transform_1, window_bounds = array<i64: 1, 288, 32>}, {transform_indices = @transform_2, window_bounds = array<i64: 1, 1, 32>}, {transform_indices = @transform_3, window_bounds = array<i64: 1, 1, 32>}, {pipeline_mode = #tpu.pipeline_mode<synchronous>, transform_indices = @transform_4, window_bounds = array<i64: 32, 2>}, {pipeline_mode = #tpu.pipeline_mode<synchronous>, transform_indices = @transform_5, window_bounds = array<i64: 1, 2>}, {pipeline_mode = #tpu.pipeline_mode<synchronous>, transform_indices = @transform_6, window_bounds = array<i64: 2, 64, 64>}, {pipeline_mode = #tpu.pipeline_mode<synchronous>, transform_indices = @transform_7, window_bounds = array<i64: 1, 64>}, {pipeline_mode = #tpu.pipeline_mode<synchronous>, transform_indices = @transform_8, window_bounds = array<i64: 2, 64>}]} {
    %c0_i32 = arith.constant 0 : i32
    %0 = arith.cmpi eq, %arg0, %c0_i32 : i32
    %1 = arith.extui %0 : i1 to i32
    %c0_i32_0 = arith.constant 0 : i32
    %2 = arith.cmpi ne, %1, %c0_i32_0 : i32
    scf.if %2 {
      %cst_78 = arith.constant 0.000000e+00 : f32
      %92 = vector.broadcast %cst_78 : f32 to vector<2x10x10x32xf32>
      %c0_79 = arith.constant 0 : index
      %c0_80 = arith.constant 0 : index
      %c0_81 = arith.constant 0 : index
      %c0_82 = arith.constant 0 : index
      %93 = vector.load %arg10[%c0_79, %c0_80, %c0_81, %c0_82] : memref<2x10x10x32xf32, #tpu.memory_space<vmem>>, vector<2x10x10x32xf32>
      tpu.vector_store %arg10[%c0_79, %c0_80, %c0_81, %c0_82], %92 {strides = array<i32>} : memref<2x10x10x32xf32, #tpu.memory_space<vmem>>, vector<2x10x10x32xf32>,
      %c0_83 = arith.constant 0 : index
      %c0_84 = arith.constant 0 : index
      %c0_85 = arith.constant 0 : index
      %c0_86 = arith.constant 0 : index
      %94 = vector.load %arg1[%c0_83, %c0_84, %c0_85, %c0_86] : memref<2x8x8x32xf32, #tpu.memory_space<vmem>>, vector<2x8x8x32xf32>
      %c0_87 = arith.constant 0 : index
      %c1_88 = arith.constant 1 : index
      %c1_89 = arith.constant 1 : index
      %c0_90 = arith.constant 0 : index
      %95 = vector.load %arg10[%c0_87, %c1_88, %c1_89, %c0_90] : memref<2x10x10x32xf32, #tpu.memory_space<vmem>>, vector<2x8x8x32xf32>
      tpu.vector_store %arg10[%c0_87, %c1_88, %c1_89, %c0_90], %94 {strides = array<i32>} : memref<2x10x10x32xf32, #tpu.memory_space<vmem>>, vector<2x8x8x32xf32>,
      %cst_91 = arith.constant 0.000000e+00 : f32
      %96 = vector.broadcast %cst_91 : f32 to vector<128x32xf32>
      %c0_92 = arith.constant 0 : index
      %c0_93 = arith.constant 0 : index
      %97 = vector.load %arg12[%c0_92, %c0_93] : memref<128x32xf32, #tpu.memory_space<vmem>>, vector<128x32xf32>
      tpu.vector_store %arg12[%c0_92, %c0_93], %96 {strides = array<i32>} : memref<128x32xf32, #tpu.memory_space<vmem>>, vector<128x32xf32>,
    } else {
    }
    %c0 = arith.constant 0 : index
    %c0_1 = arith.constant 0 : index
    %c0_2 = arith.constant 0 : index
    %c0_3 = arith.constant 0 : index
    %3 = vector.load %arg10[%c0, %c0_1, %c0_2, %c0_3] : memref<2x10x10x32xf32, #tpu.memory_space<vmem>>, vector<2x8x8x32xf32>
    %4 = vector.shape_cast %3 : vector<2x8x8x32xf32> to vector<128x32xf32>
    %5 = arith.truncf %4 : vector<128x32xf32> to vector<128x32xbf16>
    %c0_4 = arith.constant 0 : index
    %c0_5 = arith.constant 0 : index
    %6 = vector.load %arg11[%c0_4, %c0_5] : memref<128x288xbf16, #tpu.memory_space<vmem>>, vector<128x32xbf16>
    tpu.vector_store %arg11[%c0_4, %c0_5], %5 {strides = array<i32>} : memref<128x288xbf16, #tpu.memory_space<vmem>>, vector<128x32xbf16>,
    %c0_6 = arith.constant 0 : index
    %c0_7 = arith.constant 0 : index
    %c1 = arith.constant 1 : index
    %c0_8 = arith.constant 0 : index
    %7 = vector.load %arg10[%c0_6, %c0_7, %c1, %c0_8] : memref<2x10x10x32xf32, #tpu.memory_space<vmem>>, vector<2x8x8x32xf32>
    %8 = vector.shape_cast %7 : vector<2x8x8x32xf32> to vector<128x32xf32>
    %9 = arith.truncf %8 : vector<128x32xf32> to vector<128x32xbf16>
    %c0_9 = arith.constant 0 : index
    %c32 = arith.constant 32 : index
    %10 = vector.load %arg11[%c0_9, %c32] : memref<128x288xbf16, #tpu.memory_space<vmem>>, vector<128x32xbf16>
    tpu.vector_store %arg11[%c0_9, %c32], %9 {strides = array<i32>} : memref<128x288xbf16, #tpu.memory_space<vmem>>, vector<128x32xbf16>,
    %c0_10 = arith.constant 0 : index
    %c0_11 = arith.constant 0 : index
    %c2 = arith.constant 2 : index
    %c0_12 = arith.constant 0 : index
    %11 = vector.load %arg10[%c0_10, %c0_11, %c2, %c0_12] : memref<2x10x10x32xf32, #tpu.memory_space<vmem>>, vector<2x8x8x32xf32>
    %12 = vector.shape_cast %11 : vector<2x8x8x32xf32> to vector<128x32xf32>
    %13 = arith.truncf %12 : vector<128x32xf32> to vector<128x32xbf16>
    %c0_13 = arith.constant 0 : index
    %c64 = arith.constant 64 : index
    %14 = vector.load %arg11[%c0_13, %c64] : memref<128x288xbf16, #tpu.memory_space<vmem>>, vector<128x32xbf16>
    tpu.vector_store %arg11[%c0_13, %c64], %13 {strides = array<i32>} : memref<128x288xbf16, #tpu.memory_space<vmem>>, vector<128x32xbf16>,
    %c0_14 = arith.constant 0 : index
    %c1_15 = arith.constant 1 : index
    %c0_16 = arith.constant 0 : index
    %c0_17 = arith.constant 0 : index
    %15 = vector.load %arg10[%c0_14, %c1_15, %c0_16, %c0_17] : memref<2x10x10x32xf32, #tpu.memory_space<vmem>>, vector<2x8x8x32xf32>
    %16 = vector.shape_cast %15 : vector<2x8x8x32xf32> to vector<128x32xf32>
    %17 = arith.truncf %16 : vector<128x32xf32> to vector<128x32xbf16>
    %c0_18 = arith.constant 0 : index
    %c96 = arith.constant 96 : index
    %18 = vector.load %arg11[%c0_18, %c96] : memref<128x288xbf16, #tpu.memory_space<vmem>>, vector<128x32xbf16>
    tpu.vector_store %arg11[%c0_18, %c96], %17 {strides = array<i32>} : memref<128x288xbf16, #tpu.memory_space<vmem>>, vector<128x32xbf16>,
    %c0_19 = arith.constant 0 : index
    %c1_20 = arith.constant 1 : index
    %c1_21 = arith.constant 1 : index
    %c0_22 = arith.constant 0 : index
    %19 = vector.load %arg10[%c0_19, %c1_20, %c1_21, %c0_22] : memref<2x10x10x32xf32, #tpu.memory_space<vmem>>, vector<2x8x8x32xf32>
    %20 = vector.shape_cast %19 : vector<2x8x8x32xf32> to vector<128x32xf32>
    %21 = arith.truncf %20 : vector<128x32xf32> to vector<128x32xbf16>
    %c0_23 = arith.constant 0 : index
    %c128 = arith.constant 128 : index
    %22 = vector.load %arg11[%c0_23, %c128] : memref<128x288xbf16, #tpu.memory_space<vmem>>, vector<128x32xbf16>
    tpu.vector_store %arg11[%c0_23, %c128], %21 {strides = array<i32>} : memref<128x288xbf16, #tpu.memory_space<vmem>>, vector<128x32xbf16>,
    %c0_24 = arith.constant 0 : index
    %c1_25 = arith.constant 1 : index
    %c2_26 = arith.constant 2 : index
    %c0_27 = arith.constant 0 : index
    %23 = vector.load %arg10[%c0_24, %c1_25, %c2_26, %c0_27] : memref<2x10x10x32xf32, #tpu.memory_space<vmem>>, vector<2x8x8x32xf32>
    %24 = vector.shape_cast %23 : vector<2x8x8x32xf32> to vector<128x32xf32>
    %25 = arith.truncf %24 : vector<128x32xf32> to vector<128x32xbf16>
    %c0_28 = arith.constant 0 : index
    %c160 = arith.constant 160 : index
    %26 = vector.load %arg11[%c0_28, %c160] : memref<128x288xbf16, #tpu.memory_space<vmem>>, vector<128x32xbf16>
    tpu.vector_store %arg11[%c0_28, %c160], %25 {strides = array<i32>} : memref<128x288xbf16, #tpu.memory_space<vmem>>, vector<128x32xbf16>,
    %c0_29 = arith.constant 0 : index
    %c2_30 = arith.constant 2 : index
    %c0_31 = arith.constant 0 : index
    %c0_32 = arith.constant 0 : index
    %27 = vector.load %arg10[%c0_29, %c2_30, %c0_31, %c0_32] : memref<2x10x10x32xf32, #tpu.memory_space<vmem>>, vector<2x8x8x32xf32>
    %28 = vector.shape_cast %27 : vector<2x8x8x32xf32> to vector<128x32xf32>
    %29 = arith.truncf %28 : vector<128x32xf32> to vector<128x32xbf16>
    %c0_33 = arith.constant 0 : index
    %c192 = arith.constant 192 : index
    %30 = vector.load %arg11[%c0_33, %c192] : memref<128x288xbf16, #tpu.memory_space<vmem>>, vector<128x32xbf16>
    tpu.vector_store %arg11[%c0_33, %c192], %29 {strides = array<i32>} : memref<128x288xbf16, #tpu.memory_space<vmem>>, vector<128x32xbf16>,
    %c0_34 = arith.constant 0 : index
    %c2_35 = arith.constant 2 : index
    %c1_36 = arith.constant 1 : index
    %c0_37 = arith.constant 0 : index
    %31 = vector.load %arg10[%c0_34, %c2_35, %c1_36, %c0_37] : memref<2x10x10x32xf32, #tpu.memory_space<vmem>>, vector<2x8x8x32xf32>
    %32 = vector.shape_cast %31 : vector<2x8x8x32xf32> to vector<128x32xf32>
    %33 = arith.truncf %32 : vector<128x32xf32> to vector<128x32xbf16>
    %c0_38 = arith.constant 0 : index
    %c224 = arith.constant 224 : index
    %34 = vector.load %arg11[%c0_38, %c224] : memref<128x288xbf16, #tpu.memory_space<vmem>>, vector<128x32xbf16>
    tpu.vector_store %arg11[%c0_38, %c224], %33 {strides = array<i32>} : memref<128x288xbf16, #tpu.memory_space<vmem>>, vector<128x32xbf16>,
    %c0_39 = arith.constant 0 : index
    %c2_40 = arith.constant 2 : index
    %c2_41 = arith.constant 2 : index
    %c0_42 = arith.constant 0 : index
    %35 = vector.load %arg10[%c0_39, %c2_40, %c2_41, %c0_42] : memref<2x10x10x32xf32, #tpu.memory_space<vmem>>, vector<2x8x8x32xf32>
    %36 = vector.shape_cast %35 : vector<2x8x8x32xf32> to vector<128x32xf32>
    %37 = arith.truncf %36 : vector<128x32xf32> to vector<128x32xbf16>
    %c0_43 = arith.constant 0 : index
    %c256 = arith.constant 256 : index
    %38 = vector.load %arg11[%c0_43, %c256] : memref<128x288xbf16, #tpu.memory_space<vmem>>, vector<128x32xbf16>
    tpu.vector_store %arg11[%c0_43, %c256], %37 {strides = array<i32>} : memref<128x288xbf16, #tpu.memory_space<vmem>>, vector<128x32xbf16>,
    %c0_44 = arith.constant 0 : index
    %c0_45 = arith.constant 0 : index
    %39 = vector.load %arg11[%c0_44, %c0_45] : memref<128x288xbf16, #tpu.memory_space<vmem>>, vector<128x288xbf16>
    %c0_46 = arith.constant 0 : index
    %c0_47 = arith.constant 0 : index
    %c0_48 = arith.constant 0 : index
    %40 = vector.load %arg2[%c0_46, %c0_47, %c0_48] : memref<1x288x32xbf16, #tpu.memory_space<vmem>>, vector<1x288x32xbf16>
    %41 = vector.shape_cast %40 : vector<1x288x32xbf16> to vector<288x32xbf16>
    %cst = arith.constant dense<0.000000e+00> : vector<128x32xf32>
    %42 = tpu.matmul %39, %41, %cst {dimension_numbers = #tpu.dot_dimension_numbers<[1], [0], [0], [1], [0, 0, 1, 1], [], []>} : vector<128x288xbf16>, vector<288x32xbf16>, vector<128x32xf32> -> vector<128x32xf32>
    %c0_49 = arith.constant 0 : index
    %c0_50 = arith.constant 0 : index
    %c0_51 = arith.constant 0 : index
    %43 = vector.load %arg3[%c0_49, %c0_50, %c0_51] : memref<1x1x32xf32, #tpu.memory_space<vmem>>, vector<1x1x32xf32>
    %44 = vector.shape_cast %43 : vector<1x1x32xf32> to vector<1x32xf32>
    %45 = vector.broadcast %44 : vector<1x32xf32> to vector<128x32xf32>
    %46 = arith.mulf %42, %45 : vector<128x32xf32>
    %c0_52 = arith.constant 0 : index
    %c0_53 = arith.constant 0 : index
    %c0_54 = arith.constant 0 : index
    %47 = vector.load %arg4[%c0_52, %c0_53, %c0_54] : memref<1x1x32xf32, #tpu.memory_space<vmem>>, vector<1x1x32xf32>
    %48 = vector.shape_cast %47 : vector<1x1x32xf32> to vector<1x32xf32>
    %49 = vector.broadcast %48 : vector<1x32xf32> to vector<128x32xf32>
    %50 = arith.addf %46, %49 : vector<128x32xf32>
    %c2_i32 = arith.constant 2 : i32
    %51 = arith.cmpi sge, %arg0, %c2_i32 : i32
    %c2_i32_55 = arith.constant 2 : i32
    %c0_i32_56 = arith.constant 0 : i32
    %52 = arith.cmpi eq, %c2_i32_55, %c0_i32_56 : i32
    %c1_i32 = arith.constant 1 : i32
    %53 = arith.select %52, %c1_i32, %c2_i32_55 : i32
    %54 = arith.remsi %arg0, %53 : i32
    %c0_i32_57 = arith.constant 0 : i32
    %55 = arith.cmpi ne, %54, %c0_i32_57 : i32
    %c0_i32_58 = arith.constant 0 : i32
    %56 = arith.cmpi slt, %54, %c0_i32_58 : i32
    %c0_i32_59 = arith.constant 0 : i32
    %57 = arith.cmpi slt, %53, %c0_i32_59 : i32
    %58 = arith.xori %56, %57 : i1
    %59 = arith.andi %58, %55 : i1
    %60 = arith.addi %54, %53 : i32
    %61 = arith.select %59, %60, %54 : i32
    %c0_i32_60 = arith.constant 0 : i32
    %62 = arith.cmpi eq, %61, %c0_i32_60 : i32
    %63 = arith.andi %51, %62 : i1
    %64 = arith.extui %63 : i1 to i32
    %65 = arith.sitofp %64 : i32 to f32
    %c0_61 = arith.constant 0 : index
    %c0_62 = arith.constant 0 : index
    %66 = vector.load %arg12[%c0_61, %c0_62] : memref<128x32xf32, #tpu.memory_space<vmem>>, vector<128x32xf32>
    %67 = vector.broadcast %65 : f32 to vector<128x32xf32>
    %68 = arith.mulf %67, %66 : vector<128x32xf32>
    %69 = arith.addf %50, %68 : vector<128x32xf32>
    %cst_63 = arith.constant 0.000000e+00 : f32
    %70 = vector.broadcast %cst_63 : f32 to vector<128x32xf32>
    %71 = arith.maximumf %69, %70 : vector<128x32xf32>
    %c2_i32_64 = arith.constant 2 : i32
    %c0_i32_65 = arith.constant 0 : i32
    %72 = arith.cmpi eq, %c2_i32_64, %c0_i32_65 : i32
    %c1_i32_66 = arith.constant 1 : i32
    %73 = arith.select %72, %c1_i32_66, %c2_i32_64 : i32
    %74 = arith.remsi %arg0, %73 : i32
    %c0_i32_67 = arith.constant 0 : i32
    %75 = arith.cmpi ne, %74, %c0_i32_67 : i32
    %c0_i32_68 = arith.constant 0 : i32
    %76 = arith.cmpi slt, %74, %c0_i32_68 : i32
    %c0_i32_69 = arith.constant 0 : i32
    %77 = arith.cmpi slt, %73, %c0_i32_69 : i32
    %78 = arith.xori %76, %77 : i1
    %79 = arith.andi %78, %75 : i1
    %80 = arith.addi %74, %73 : i32
    %81 = arith.select %79, %80, %74 : i32
    %c0_i32_70 = arith.constant 0 : i32
    %82 = arith.cmpi eq, %81, %c0_i32_70 : i32
    %c20_i32 = arith.constant 20 : i32
    %83 = arith.cmpi slt, %arg0, %c20_i32 : i32
    %84 = arith.andi %82, %83 : i1
    %85 = arith.extui %84 : i1 to i32
    %c0_i32_71 = arith.constant 0 : i32
    %86 = arith.cmpi ne, %85, %c0_i32_71 : i32
    scf.if %86 {
      %c0_78 = arith.constant 0 : index
      %c0_79 = arith.constant 0 : index
      %92 = vector.load %arg12[%c0_78, %c0_79] : memref<128x32xf32, #tpu.memory_space<vmem>>, vector<128x32xf32>
      tpu.vector_store %arg12[%c0_78, %c0_79], %71 {strides = array<i32>} : memref<128x32xf32, #tpu.memory_space<vmem>>, vector<128x32xf32>,
    } else {
    }
    %87 = vector.shape_cast %71 : vector<128x32xf32> to vector<2x8x8x32xf32>
    %c0_72 = arith.constant 0 : index
    %c1_73 = arith.constant 1 : index
    %c1_74 = arith.constant 1 : index
    %c0_75 = arith.constant 0 : index
    %88 = vector.load %arg10[%c0_72, %c1_73, %c1_74, %c0_75] : memref<2x10x10x32xf32, #tpu.memory_space<vmem>>, vector<2x8x8x32xf32>
    tpu.vector_store %arg10[%c0_72, %c1_73, %c1_74, %c0_75], %87 {strides = array<i32>} : memref<2x10x10x32xf32, #tpu.memory_space<vmem>>, vector<2x8x8x32xf32>,
    %c20_i32_76 = arith.constant 20 : i32
    %89 = arith.cmpi eq, %arg0, %c20_i32_76 : i32
    %90 = arith.extui %89 : i1 to i32
    %c0_i32_77 = arith.constant 0 : i32
    %91 = arith.cmpi ne, %90, %c0_i32_77 : i32
    scf.if %91 {
      %c0_78 = arith.constant 0 : index
      %c0_79 = arith.constant 0 : index
      %92 = vector.load %arg5[%c0_78, %c0_79] : memref<32x2xf32, #tpu.memory_space<vmem>>, vector<32x2xf32>
      %cst_80 = arith.constant dense<0.000000e+00> : vector<128x2xf32>
      %93 = tpu.matmul %71, %92, %cst_80 {dimension_numbers = #tpu.dot_dimension_numbers<[1], [0], [0], [1], [0, 0, 1, 1], [], []>} : vector<128x32xf32>, vector<32x2xf32>, vector<128x2xf32> -> vector<128x2xf32>
      %c0_81 = arith.constant 0 : index
      %c0_82 = arith.constant 0 : index
      %94 = vector.load %arg6[%c0_81, %c0_82] : memref<1x2xf32, #tpu.memory_space<vmem>>, vector<1x2xf32>
      %95 = vector.broadcast %94 : vector<1x2xf32> to vector<128x2xf32>
      %96 = arith.addf %93, %95 : vector<128x2xf32>
      %cst_83 = arith.constant 0.000000e+00 : f32
      %97 = vector.broadcast %cst_83 : f32 to vector<128x2xf32>
      %98 = arith.maximumf %96, %97 : vector<128x2xf32>
      %99 = vector.extract_strided_slice %98 {offsets = [0, 0], sizes = [64, 1], strides = [1, 1]} : vector<128x2xf32> to vector<64x1xf32>
      %100 = vector.extract_strided_slice %98 {offsets = [0, 1], sizes = [64, 1], strides = [1, 1]} : vector<128x2xf32> to vector<64x1xf32>
      %c0_84 = arith.constant 0 : index
      %c0_85 = arith.constant 0 : index
      %c0_86 = arith.constant 0 : index
      %101 = vector.load %arg7[%c0_84, %c0_85, %c0_86] : memref<2x64x64xf32, #tpu.memory_space<vmem>>, vector<1x64x64xf32>
      %102 = vector.shape_cast %101 : vector<1x64x64xf32> to vector<64x64xf32>
      %103 = vector.broadcast %99 : vector<64x1xf32> to vector<64x64xf32>
      %104 = arith.mulf %103, %102 : vector<64x64xf32>
      %c1_87 = arith.constant 1 : index
      %c0_88 = arith.constant 0 : index
      %c0_89 = arith.constant 0 : index
      %105 = vector.load %arg7[%c1_87, %c0_88, %c0_89] : memref<2x64x64xf32, #tpu.memory_space<vmem>>, vector<1x64x64xf32>
      %106 = vector.shape_cast %105 : vector<1x64x64xf32> to vector<64x64xf32>
      %107 = vector.broadcast %100 : vector<64x1xf32> to vector<64x64xf32>
      %108 = arith.mulf %107, %106 : vector<64x64xf32>
      %109 = arith.addf %104, %108 : vector<64x64xf32>
      %cst_90 = arith.constant dense<0.000000e+00> : vector<64xf32>
      %110 = vector.multi_reduction <add>, %109, %cst_90 [0] : vector<64x64xf32> to vector<64xf32>
      %111 = vector.shape_cast %110 : vector<64xf32> to vector<1x64xf32>
      %112 = vector.extract_strided_slice %98 {offsets = [64, 0], sizes = [64, 1], strides = [1, 1]} : vector<128x2xf32> to vector<64x1xf32>
      %113 = vector.extract_strided_slice %98 {offsets = [64, 1], sizes = [64, 1], strides = [1, 1]} : vector<128x2xf32> to vector<64x1xf32>
      %c0_91 = arith.constant 0 : index
      %c0_92 = arith.constant 0 : index
      %c0_93 = arith.constant 0 : index
      %114 = vector.load %arg7[%c0_91, %c0_92, %c0_93] : memref<2x64x64xf32, #tpu.memory_space<vmem>>, vector<1x64x64xf32>
      %115 = vector.shape_cast %114 : vector<1x64x64xf32> to vector<64x64xf32>
      %116 = vector.broadcast %112 : vector<64x1xf32> to vector<64x64xf32>
      %117 = arith.mulf %116, %115 : vector<64x64xf32>
      %c1_94 = arith.constant 1 : index
      %c0_95 = arith.constant 0 : index
      %c0_96 = arith.constant 0 : index
      %118 = vector.load %arg7[%c1_94, %c0_95, %c0_96] : memref<2x64x64xf32, #tpu.memory_space<vmem>>, vector<1x64x64xf32>
      %119 = vector.shape_cast %118 : vector<1x64x64xf32> to vector<64x64xf32>
      %120 = vector.broadcast %113 : vector<64x1xf32> to vector<64x64xf32>
      %121 = arith.mulf %120, %119 : vector<64x64xf32>
      %122 = arith.addf %117, %121 : vector<64x64xf32>
      %cst_97 = arith.constant dense<0.000000e+00> : vector<64xf32>
      %123 = vector.multi_reduction <add>, %122, %cst_97 [0] : vector<64x64xf32> to vector<64xf32>
      %124 = vector.shape_cast %123 : vector<64xf32> to vector<1x64xf32>
      %125 = tpu.concatenate %111, %124 in 0 : vector<1x64xf32>, vector<1x64xf32> -> vector<2x64xf32>
      %c0_98 = arith.constant 0 : index
      %c0_99 = arith.constant 0 : index
      %126 = vector.load %arg8[%c0_98, %c0_99] : memref<1x64xf32, #tpu.memory_space<vmem>>, vector<1x64xf32>
      %127 = vector.broadcast %126 : vector<1x64xf32> to vector<2x64xf32>
      %128 = arith.addf %125, %127 : vector<2x64xf32>
      %c0_100 = arith.constant 0 : index
      %c0_101 = arith.constant 0 : index
      %129 = vector.load %arg9[%c0_100, %c0_101] : memref<2x64xf32, #tpu.memory_space<vmem>>, vector<2x64xf32>
      tpu.vector_store %arg9[%c0_100, %c0_101], %128 {strides = array<i32>} : memref<2x64xf32, #tpu.memory_space<vmem>>, vector<2x64xf32>,
    } else {
    }
    return
  }
  func.func @transform_0(%arg0: i32) -> (i32, i32, i32, i32) {
    %c0_i32 = arith.constant 0 : i32
    %c0_i32_0 = arith.constant 0 : i32
    %c0_i32_1 = arith.constant 0 : i32
    %c0_i32_2 = arith.constant 0 : i32
    %c0_i32_3 = arith.constant 0 : i32
    return %c0_i32, %c0_i32_0, %c0_i32_1, %c0_i32_2 : i32, i32, i32, i32
  }
  func.func @transform_1(%arg0: i32) -> (i32, i32, i32) {
    %c0_i32 = arith.constant 0 : i32
    %c0_i32_0 = arith.constant 0 : i32
    %c0_i32_1 = arith.constant 0 : i32
    return %arg0, %c0_i32, %c0_i32_0 : i32, i32, i32
  }
  func.func @transform_2(%arg0: i32) -> (i32, i32, i32) {
    %c0_i32 = arith.constant 0 : i32
    %c0_i32_0 = arith.constant 0 : i32
    %c0_i32_1 = arith.constant 0 : i32
    return %arg0, %c0_i32, %c0_i32_0 : i32, i32, i32
  }
  func.func @transform_3(%arg0: i32) -> (i32, i32, i32) {
    %c0_i32 = arith.constant 0 : i32
    %c0_i32_0 = arith.constant 0 : i32
    %c0_i32_1 = arith.constant 0 : i32
    return %arg0, %c0_i32, %c0_i32_0 : i32, i32, i32
  }
  func.func @transform_4(%arg0: i32) -> (i32, i32) {
    %c0_i32 = arith.constant 0 : i32
    %c0_i32_0 = arith.constant 0 : i32
    %c0_i32_1 = arith.constant 0 : i32
    return %c0_i32, %c0_i32_0 : i32, i32
  }
  func.func @transform_5(%arg0: i32) -> (i32, i32) {
    %c0_i32 = arith.constant 0 : i32
    %c0_i32_0 = arith.constant 0 : i32
    %c0_i32_1 = arith.constant 0 : i32
    return %c0_i32, %c0_i32_0 : i32, i32
  }
  func.func @transform_6(%arg0: i32) -> (i32, i32, i32) {
    %c0_i32 = arith.constant 0 : i32
    %c0_i32_0 = arith.constant 0 : i32
    %c0_i32_1 = arith.constant 0 : i32
    %c0_i32_2 = arith.constant 0 : i32
    return %c0_i32, %c0_i32_0, %c0_i32_1 : i32, i32, i32
  }
  func.func @transform_7(%arg0: i32) -> (i32, i32) {
    %c0_i32 = arith.constant 0 : i32
    %c0_i32_0 = arith.constant 0 : i32
    %c0_i32_1 = arith.constant 0 : i32
    return %c0_i32, %c0_i32_0 : i32, i32
  }
  func.func @transform_8(%arg0: i32) -> (i32, i32) {
    %c0_i32 = arith.constant 0 : i32
    %c0_i32_0 = arith.constant 0 : i32
    %c0_i32_1 = arith.constant 0 : i32
    return %c0_i32, %c0_i32_0 : i32, i32
  }
}

</mosaic_0001>

<llo_original>
// kernel: policy_net_forward.1
$region0: #{policy_net_forward.1}
  #allocation0 [shape = 'u32[]', space=smem, size = 0x4, offset = 0x4, fixed_abs, tag = 'smem constant byte address 0x4 - core index']
  #allocation1 [shape = 'u32[72,128]{1,0:T(1,128)}', space=vmem, size = 0x9000, scoped, tag = 'internal scratch']
  #allocation2 [shape = 'f32[2,10,10,32]{3,2,1,0:T(8,128)}', space=vmem, size = 0x28000, scoped, tag = 'scratch operand']
  #allocation3 [shape = 'bf16[128,288]{1,0:T(8,128)(2,1)}', space=vmem, size = 0x18000, scoped, tag = 'scratch operand']
  #allocation4 [shape = 'f32[128,32]{1,0:T(8,128)}', space=vmem, size = 0x10000, scoped, tag = 'scratch operand']
  %s0 = inlined_call_operand.vmem [shape: f32[2,8,8,32], index: 0, kind: input, shape index: {}]
  %s1 = inlined_call_operand.vmem [shape: bf16[21,288,32], index: 1, kind: input, shape index: {}]
  %s2 = inlined_call_operand.vmem [shape: f32[21,1,32], index: 2, kind: input, shape index: {}]
  %s3 = inlined_call_operand.vmem [shape: f32[21,1,32], index: 3, kind: input, shape index: {}]
  %s4 = inlined_call_operand.vmem [shape: f32[32,2], index: 4, kind: input, shape index: {}]
  %s5 = inlined_call_operand.vmem [shape: f32[1,2], index: 5, kind: input, shape index: {}]
  %s6 = inlined_call_operand.vmem [shape: f32[2,64,64], index: 6, kind: input, shape index: {}]
  %s7 = inlined_call_operand.vmem [shape: f32[1,64], index: 7, kind: input, shape index: {}]
  %s8 = inlined_call_operand.hbm [shape: f32[2,64], index: 8, kind: output, shape index: {}]
  %s9 = sld [smem:[#allocation0]]
  $region77: #{policy_net_forward.1} parent=0
    _
  %s11 = ssub.s32 1, %s9
  %s12 = scalar_select 0, %s11, %s9
  $region1: #{policy_net_forward.1} parent=0
    #allocation5 [shape = 'u8[1024]{0}', space=vmem, size = 0x400, scoped, tag = 'output window, operand 0, single buffered']
    #allocation6 [shape = 's32[2]{0}', space=sflag, size = 0x8, scoped, tag = 'scoped memory for policy_net_forward.1']
    %13 = vsyncpa [#allocation6], 0
    loop: start=0, step=1, limit=23
    $region2: #{policy_net_forward.1} parent=1 // loop_pre_header
      _
    $region3: #{policy_net_forward.1} parent=1 // loop_header
      %s15 = sphi 0, %s19
      %p16 = scmp.ge.s32.totalorder %s15, 23
      %s23 = sphi 0, %s23
      %s25 = sphi 0, %s23
      %s26 = sphi 0, %s25
      %s40 = sphi 0, %s26
      %s46 = sphi 0, %s48
      %s49 = sphi 0, %s46
      %s50 = sphi 0, %s49
      %s66 = sphi 0, %s50
      %s72 = sphi 0, %s74
      %s75 = sphi 0, %s72
      %s76 = sphi 0, %s75
      %s92 = sphi 0, %s76
      %s98 = sphi 0, %s100
      %s101 = sphi 0, %s98
      %s102 = sphi 0, %s101
      %s118 = sphi 0, %s102
      %s122 = sphi 0, %s122
      %s124 = sphi 0, %s122
      %s125 = sphi 0, %s124
      %s139 = sphi 0, %s125
      %s143 = sphi 0, %s143
      %s145 = sphi 0, %s143
      %s146 = sphi 0, %s145
      %s160 = sphi 0, %s146
      %s164 = sphi 0, %s164
      %s166 = sphi 0, %s164
      %s167 = sphi 0, %s166
      %s181 = sphi 0, %s167
      %s185 = sphi 0, %s185
      %s187 = sphi 0, %s185
      %s188 = sphi 0, %s187
      %s202 = sphi 0, %s188
      %s206 = sphi 0, %s206
      %s208 = sphi 0, %s206
      %s209 = sphi 0, %s208
      %s223 = sphi 0, %s209
    $region4: #{policy_net_forward.1} parent=1 // loop_header_branch
      %18 = sbr.rel (%p16) target = $region8
    $region5: #{policy_net_forward.1} parent=1 // loop_body
      %s20 = ssub.s32 %s15, 1
      %s21 = ssub.s32 %s15, 2
      %s22 = sadd.s32 %s15, 1
      %s24 = sadd.s32 %s23, 1
      %p27 = scmp.eq.s32.totalorder %s15, 20
      %p28 = scmp.ne.s32.totalorder %s23, %s25
      %p29 = scmp.eq.s32.totalorder %s15, 0
      %p30 = por %p28, %p29
      %p31 = scmp.ne.s32.totalorder %s23, %s25
      %p32 = scmp.eq.s32.totalorder %s20, 20
      %p33 = por %p31, %p32
      %p34 = scmp.ne.s32.totalorder %s25, %s26
      %p35 = scmp.eq.s32.totalorder %s20, 0
      %p36 = por %p34, %p35
      %p37 = scmp.ne.s32.totalorder %s25, %s26
      %p38 = scmp.eq.s32.totalorder %s21, 20
      %p39 = por %p37, %p38
      %p41 = scmp.ne.s32.totalorder %s26, %s40
      %p42 = scmp.eq.s32.totalorder %s21, 0
      %p43 = por %p41, %p42
      %s44 = ssub.s32 %s15, %s22
      %p45 = scmp.eq.s32.totalorder %s44, 0
      %s47 = sadd.s32 %s46, 1
      %s48 = scalar_select %p45, %s46, %s47
      %p51 = pneg %p45
      %p52 = scmp.eq.s32.totalorder %s15, 20
      %p53 = por %p51, %p52
      %p54 = scmp.ne.s32.totalorder %s46, %s49
      %p55 = scmp.eq.s32.totalorder %s15, 0
      %p56 = por %p54, %p55
      %p57 = scmp.ne.s32.totalorder %s46, %s49
      %p58 = scmp.eq.s32.totalorder %s20, 20
      %p59 = por %p57, %p58
      %p60 = scmp.ne.s32.totalorder %s49, %s50
      %p61 = scmp.eq.s32.totalorder %s20, 0
      %p62 = por %p60, %p61
      %p63 = scmp.ne.s32.totalorder %s49, %s50
      %p64 = scmp.eq.s32.totalorder %s21, 20
      %p65 = por %p63, %p64
      %p67 = scmp.ne.s32.totalorder %s50, %s66
      %p68 = scmp.eq.s32.totalorder %s21, 0
      %p69 = por %p67, %p68
      %s70 = ssub.s32 %s15, %s22
      %p71 = scmp.eq.s32.totalorder %s70, 0
      %s73 = sadd.s32 %s72, 1
      %s74 = scalar_select %p71, %s72, %s73
      %p77 = pneg %p71
      %p78 = scmp.eq.s32.totalorder %s15, 20
      %p79 = por %p77, %p78
      %p80 = scmp.ne.s32.totalorder %s72, %s75
      %p81 = scmp.eq.s32.totalorder %s15, 0
      %p82 = por %p80, %p81
      %p83 = scmp.ne.s32.totalorder %s72, %s75
      %p84 = scmp.eq.s32.totalorder %s20, 20
      %p85 = por %p83, %p84
      %p86 = scmp.ne.s32.totalorder %s75, %s76
      %p87 = scmp.eq.s32.totalorder %s20, 0
      %p88 = por %p86, %p87
      %p89 = scmp.ne.s32.totalorder %s75, %s76
      %p90 = scmp.eq.s32.totalorder %s21, 20
      %p91 = por %p89, %p90
      %p93 = scmp.ne.s32.totalorder %s76, %s92
      %p94 = scmp.eq.s32.totalorder %s21, 0
      %p95 = por %p93, %p94
      %s96 = ssub.s32 %s15, %s22
      %p97 = scmp.eq.s32.totalorder %s96, 0
      %s99 = sadd.s32 %s98, 1
      %s100 = scalar_select %p97, %s98, %s99
      %p103 = pneg %p97
      %p104 = scmp.eq.s32.totalorder %s15, 20
      %p105 = por %p103, %p104
      %p106 = scmp.ne.s32.totalorder %s98, %s101
      %p107 = scmp.eq.s32.totalorder %s15, 0
      %p108 = por %p106, %p107
      %p109 = scmp.ne.s32.totalorder %s98, %s101
      %p110 = scmp.eq.s32.totalorder %s20, 20
      %p111 = por %p109, %p110
      %p112 = scmp.ne.s32.totalorder %s101, %s102
      %p113 = scmp.eq.s32.totalorder %s20, 0
      %p114 = por %p112, %p113
      %p115 = scmp.ne.s32.totalorder %s101, %s102
      %p116 = scmp.eq.s32.totalorder %s21, 20
      %p117 = por %p115, %p116
      %p119 = scmp.ne.s32.totalorder %s102, %s118
      %p120 = scmp.eq.s32.totalorder %s21, 0
      %p121 = por %p119, %p120
      %s123 = sadd.s32 %s122, 1
      %p126 = scmp.eq.s32.totalorder %s15, 20
      %p127 = scmp.ne.s32.totalorder %s122, %s124
      %p128 = scmp.eq.s32.totalorder %s15, 0
      %p129 = por %p127, %p128
      %p130 = scmp.ne.s32.totalorder %s122, %s124
      %p131 = scmp.eq.s32.totalorder %s20, 20
      %p132 = por %p130, %p131
      %p133 = scmp.ne.s32.totalorder %s124, %s125
      %p134 = scmp.eq.s32.totalorder %s20, 0
      %p135 = por %p133, %p134
      %p136 = scmp.ne.s32.totalorder %s124, %s125
      %p137 = scmp.eq.s32.totalorder %s21, 20
      %p138 = por %p136, %p137
      %p140 = scmp.ne.s32.totalorder %s125, %s139
      %p141 = scmp.eq.s32.totalorder %s21, 0
      %p142 = por %p140, %p141
      %s144 = sadd.s32 %s143, 1
      %p147 = scmp.eq.s32.totalorder %s15, 20
      %p148 = scmp.ne.s32.totalorder %s143, %s145
      %p149 = scmp.eq.s32.totalorder %s15, 0
      %p150 = por %p148, %p149
      %p151 = scmp.ne.s32.totalorder %s143, %s145
      %p152 = scmp.eq.s32.totalorder %s20, 20
      %p153 = por %p151, %p152
      %p154 = scmp.ne.s32.totalorder %s145, %s146
      %p155 = scmp.eq.s32.totalorder %s20, 0
      %p156 = por %p154, %p155
      %p157 = scmp.ne.s32.totalorder %s145, %s146
      %p158 = scmp.eq.s32.totalorder %s21, 20
      %p159 = por %p157, %p158
      %p161 = scmp.ne.s32.totalorder %s146, %s160
      %p162 = scmp.eq.s32.totalorder %s21, 0
      %p163 = por %p161, %p162
      %s165 = sadd.s32 %s164, 1
      %p168 = scmp.eq.s32.totalorder %s15, 20
      %p169 = scmp.ne.s32.totalorder %s164, %s166
      %p170 = scmp.eq.s32.totalorder %s15, 0
      %p171 = por %p169, %p170
      %p172 = scmp.ne.s32.totalorder %s164, %s166
      %p173 = scmp.eq.s32.totalorder %s20, 20
      %p174 = por %p172, %p173
      %p175 = scmp.ne.s32.totalorder %s166, %s167
      %p176 = scmp.eq.s32.totalorder %s20, 0
      %p177 = por %p175, %p176
      %p178 = scmp.ne.s32.totalorder %s166, %s167
      %p179 = scmp.eq.s32.totalorder %s21, 20
      %p180 = por %p178, %p179
      %p182 = scmp.ne.s32.totalorder %s167, %s181
      %p183 = scmp.eq.s32.totalorder %s21, 0
      %p184 = por %p182, %p183
      %s186 = sadd.s32 %s185, 1
      %p189 = scmp.eq.s32.totalorder %s15, 20
      %p190 = scmp.ne.s32.totalorder %s185, %s187
      %p191 = scmp.eq.s32.totalorder %s15, 0
      %p192 = por %p190, %p191
      %p193 = scmp.ne.s32.totalorder %s185, %s187
      %p194 = scmp.eq.s32.totalorder %s20, 20
      %p195 = por %p193, %p194
      %p196 = scmp.ne.s32.totalorder %s187, %s188
      %p197 = scmp.eq.s32.totalorder %s20, 0
      %p198 = por %p196, %p197
      %p199 = scmp.ne.s32.totalorder %s187, %s188
      %p200 = scmp.eq.s32.totalorder %s21, 20
      %p201 = por %p199, %p200
      %p203 = scmp.ne.s32.totalorder %s188, %s202
      %p204 = scmp.eq.s32.totalorder %s21, 0
      %p205 = por %p203, %p204
      %s207 = sadd.s32 %s206, 1
      %p210 = scmp.eq.s32.totalorder %s15, 20
      %p211 = scmp.ne.s32.totalorder %s206, %s208
      %p212 = scmp.eq.s32.totalorder %s15, 0
      %p213 = por %p211, %p212
      %p214 = scmp.ne.s32.totalorder %s206, %s208
      %p215 = scmp.eq.s32.totalorder %s20, 20
      %p216 = por %p214, %p215
      %p217 = scmp.ne.s32.totalorder %s208, %s209
      %p218 = scmp.eq.s32.totalorder %s20, 0
      %p219 = por %p217, %p218
      %p220 = scmp.ne.s32.totalorder %s208, %s209
      %p221 = scmp.eq.s32.totalorder %s21, 20
      %p222 = por %p220, %p221
      %p224 = scmp.ne.s32.totalorder %s209, %s223
      %p225 = scmp.eq.s32.totalorder %s21, 0
      %p226 = por %p224, %p225
      %p227 = scmp.le.s32.totalorder 1, %s15
      %p228 = scmp.lt.s32.totalorder %s15, 22
      %p229 = pnand %p227, %p228
      %p230 = pneg %p229
      // Predicated region
      $region9: #{policy_net_forward.1} parent=5 // pred_check
        _
      $region10: #{policy_net_forward.1} parent=5 // pred_check_branch
        %232 = sbr.rel (%p229) target = $region12
      $region11: #{policy_net_forward.1} parent=5 // pred_region
        %s233 = ssub.s32 %s15, 1
        // Predicated region
        $region13: #{policy_net_forward.1} parent=11 // pred_check
          %p234 = pneg %p36
        $region14: #{policy_net_forward.1} parent=11 // pred_check_branch
          %236 = sbr.rel (%p234) target = $region16
        $region15: #{policy_net_forward.1} parent=11 // pred_region
          _
        $region16: #{policy_net_forward.1} parent=11 // pred_fallthru
          _
        // Predicated region
        $region17: #{policy_net_forward.1} parent=11 // pred_check
          %p237 = pneg %p135
        $region18: #{policy_net_forward.1} parent=11 // pred_check_branch
          %239 = sbr.rel (%p237) target = $region20
        $region19: #{policy_net_forward.1} parent=11 // pred_region
          _
        $region20: #{policy_net_forward.1} parent=11 // pred_fallthru
          _
        // Predicated region
        $region21: #{policy_net_forward.1} parent=11 // pred_check
          %p240 = pneg %p156
        $region22: #{policy_net_forward.1} parent=11 // pred_check_branch
          %242 = sbr.rel (%p240) target = $region24
        $region23: #{policy_net_forward.1} parent=11 // pred_region
          _
        $region24: #{policy_net_forward.1} parent=11 // pred_fallthru
          _
        // Predicated region
        $region25: #{policy_net_forward.1} parent=11 // pred_check
          %p243 = pneg %p177
        $region26: #{policy_net_forward.1} parent=11 // pred_check_branch
          %245 = sbr.rel (%p243) target = $region28
        $region27: #{policy_net_forward.1} parent=11 // pred_region
          _
        $region28: #{policy_net_forward.1} parent=11 // pred_fallthru
          _
        // Predicated region
        $region29: #{policy_net_forward.1} parent=11 // pred_check
          %p246 = pneg %p198
        $region30: #{policy_net_forward.1} parent=11 // pred_check_branch
          %248 = sbr.rel (%p246) target = $region32
        $region31: #{policy_net_forward.1} parent=11 // pred_region
          _
        $region32: #{policy_net_forward.1} parent=11 // pred_fallthru
          _
      $region12: #{policy_net_forward.1} parent=5 // pred_fallthru
        _
      %p249 = scmp.lt.s32.totalorder %s15, 21
      // Predicated region
      $region33: #{policy_net_forward.1} parent=5 // pred_check
        %p250 = pneg %p249
      $region34: #{policy_net_forward.1} parent=5 // pred_check_branch
        %252 = sbr.rel (%p250) target = $region36
      $region35: #{policy_net_forward.1} parent=5 // pred_region
        // Predicated region
        $region37: #{policy_net_forward.1} parent=35 // pred_check
          %p253 = pneg %p56
        $region38: #{policy_net_forward.1} parent=35 // pred_check_branch
          %255 = sbr.rel (%p253) target = $region40
        $region39: #{policy_net_forward.1} parent=35 // pred_region
          %p256 = scmp.lt.s32.totalorder %s15, 20
          %s257 = scalar_select %p256, %s15, 20
          %s258 = smul.addr %s257, 36
          %s259 = smul.addr %s258, 4
          %s260 = scalar_lea.vmem %s1, %s259
        $region40: #{policy_net_forward.1} parent=35 // pred_fallthru
          _
        // Predicated region
        $region41: #{policy_net_forward.1} parent=35 // pred_check
          %p261 = pneg %p82
        $region42: #{policy_net_forward.1} parent=35 // pred_check_branch
          %263 = sbr.rel (%p261) target = $region44
        $region43: #{policy_net_forward.1} parent=35 // pred_region
          %p264 = scmp.lt.s32.totalorder %s15, 20
          %s265 = scalar_select %p264, %s15, 20
          %s266 = scalar_lea.vmem %s2, %s265
        $region44: #{policy_net_forward.1} parent=35 // pred_fallthru
          _
        // Predicated region
        $region45: #{policy_net_forward.1} parent=35 // pred_check
          %p267 = pneg %p108
        $region46: #{policy_net_forward.1} parent=35 // pred_check_branch
          %269 = sbr.rel (%p267) target = $region48
        $region47: #{policy_net_forward.1} parent=35 // pred_region
          %p270 = scmp.lt.s32.totalorder %s15, 20
          %s271 = scalar_select %p270, %s15, 20
          %s272 = scalar_lea.vmem %s3, %s271
        $region48: #{policy_net_forward.1} parent=35 // pred_fallthru
          _
      $region36: #{policy_net_forward.1} parent=5 // pred_fallthru
        _
      %p273 = scmp.le.s32.totalorder 1, %s15
      %p274 = scmp.lt.s32.totalorder %s15, 22
      %p275 = pnand %p273, %p274
      %p276 = pneg %p275
      // Predicated region
      $region49: #{policy_net_forward.1} parent=5 // pred_check
        _
      $region50: #{policy_net_forward.1} parent=5 // pred_check_branch
        %278 = sbr.rel (%p275) target = $region52
      $region51: #{policy_net_forward.1} parent=5 // pred_region
        %s279 = ssub.s32 %s15, 1
        %p280 = pneg %p36
        %p281 = pneg %p33
        %p282 = scmp.lt.s32.totalorder %s20, 20
        %s283 = scalar_select %p282, %s20, 20
        %s284 = smul.addr %s283, 36
        %s285 = smul.addr %s284, 4
        %s286 = scalar_lea.vmem %s1, %s285
        %p287 = pneg %p62
        %p288 = pneg %p59
        %p289 = scmp.lt.s32.totalorder %s20, 20
        %s290 = scalar_select %p289, %s20, 20
        %s291 = scalar_lea.vmem %s2, %s290
        %p292 = pneg %p88
        %p293 = pneg %p85
        %p294 = scmp.lt.s32.totalorder %s20, 20
        %s295 = scalar_select %p294, %s20, 20
        %s296 = scalar_lea.vmem %s3, %s295
        %p297 = pneg %p114
        %p298 = pneg %p111
        %p299 = pneg %p135
        %p300 = pneg %p132
        %p301 = pneg %p156
        %p302 = pneg %p153
        %p303 = pneg %p177
        %p304 = pneg %p174
        %p305 = pneg %p198
        %p306 = pneg %p195
        %p307 = pneg %p219
        %p308 = pneg %p216
        %p309 = scmp.lt.s32.totalorder %s20, 20
        %s310 = scalar_select %p309, %s20, 20
        %s311 = smul.addr %s310, 36
        %s312 = smul.addr %s311, 4
        %s313 = scalar_lea.vmem %s1, %s312
        %p314 = scmp.lt.s32.totalorder %s20, 20
        %s315 = scalar_select %p314, %s20, 20
        %s316 = scalar_lea.vmem %s2, %s315
        %p317 = scmp.lt.s32.totalorder %s20, 20
        %s318 = scalar_select %p317, %s20, 20
        %s319 = scalar_lea.vmem %s3, %s318
        %p321 = scmp.eq.s32.totalorder %s20, 0
        // Predicated region
        $region53: #{policy_net_forward.1} parent=51 // pred_check
          %p322 = pneg %p321
        $region54: #{policy_net_forward.1} parent=51 // pred_check_branch
          %324 = sbr.rel (%p322) target = $region56
        $region55: #{policy_net_forward.1} parent=51 // pred_region
          %vm325 = vcmask 261120
          %326 = vst.msk [vmem:[#allocation2] sm:$0xff] %vm325, 0.0
          %vm327 = vcmask 254976
          %328 = vst.msk [vmem:[#allocation2 + $0x8] sm:$0x3] %vm327, 0.0
          %329 = vst.msk [vmem:[#allocation2 + $0x10] sm:$0xff] %vm325, 0.0
          %330 = vst.msk [vmem:[#allocation2 + $0x18] sm:$0x3] %vm327, 0.0
          %331 = vst.msk [vmem:[#allocation2 + $0x20] sm:$0xff] %vm325, 0.0
          %332 = vst.msk [vmem:[#allocation2 + $0x28] sm:$0x3] %vm327, 0.0
          %333 = vst.msk [vmem:[#allocation2 + $0x30] sm:$0xff] %vm325, 0.0
          %334 = vst.msk [vmem:[#allocation2 + $0x38] sm:$0x3] %vm327, 0.0
          %335 = vst.msk [vmem:[#allocation2 + $0x40] sm:$0xff] %vm325, 0.0
          %336 = vst.msk [vmem:[#allocation2 + $0x48] sm:$0x3] %vm327, 0.0
          %337 = vst.msk [vmem:[#allocation2 + $0x50] sm:$0xff] %vm325, 0.0
          %338 = vst.msk [vmem:[#allocation2 + $0x58] sm:$0x3] %vm327, 0.0
          %339 = vst.msk [vmem:[#allocation2 + $0x60] sm:$0xff] %vm325, 0.0
          %340 = vst.msk [vmem:[#allocation2 + $0x68] sm:$0x3] %vm327, 0.0
          %341 = vst.msk [vmem:[#allocation2 + $0x70] sm:$0xff] %vm325, 0.0
          %342 = vst.msk [vmem:[#allocation2 + $0x78] sm:$0x3] %vm327, 0.0
          %343 = vst.msk [vmem:[#allocation2 + $0x80] sm:$0xff] %vm325, 0.0
          %344 = vst.msk [vmem:[#allocation2 + $0x88] sm:$0x3] %vm327, 0.0
          %345 = vst.msk [vmem:[#allocation2 + $0x90] sm:$0xff] %vm325, 0.0
          %346 = vst.msk [vmem:[#allocation2 + $0x98] sm:$0x3] %vm327, 0.0
          %347 = vst.msk [vmem:[#allocation2 + $0xa0] sm:$0xff] %vm325, 0.0
          %348 = vst.msk [vmem:[#allocation2 + $0xa8] sm:$0x3] %vm327, 0.0
          %349 = vst.msk [vmem:[#allocation2 + $0xb0] sm:$0xff] %vm325, 0.0
          %350 = vst.msk [vmem:[#allocation2 + $0xb8] sm:$0x3] %vm327, 0.0
          %351 = vst.msk [vmem:[#allocation2 + $0xc0] sm:$0xff] %vm325, 0.0
          %352 = vst.msk [vmem:[#allocation2 + $0xc8] sm:$0x3] %vm327, 0.0
          %353 = vst.msk [vmem:[#allocation2 + $0xd0] sm:$0xff] %vm325, 0.0
          %354 = vst.msk [vmem:[#allocation2 + $0xd8] sm:$0x3] %vm327, 0.0
          %355 = vst.msk [vmem:[#allocation2 + $0xe0] sm:$0xff] %vm325, 0.0
          %356 = vst.msk [vmem:[#allocation2 + $0xe8] sm:$0x3] %vm327, 0.0
          %357 = vst.msk [vmem:[#allocation2 + $0xf0] sm:$0xff] %vm325, 0.0
          %358 = vst.msk [vmem:[#allocation2 + $0xf8] sm:$0x3] %vm327, 0.0
          %359 = vst.msk [vmem:[#allocation2 + $0x100] sm:$0xff] %vm325, 0.0
          %360 = vst.msk [vmem:[#allocation2 + $0x108] sm:$0x3] %vm327, 0.0
          %361 = vst.msk [vmem:[#allocation2 + $0x110] sm:$0xff] %vm325, 0.0
          %362 = vst.msk [vmem:[#allocation2 + $0x118] sm:$0x3] %vm327, 0.0
          %363 = vst.msk [vmem:[#allocation2 + $0x120] sm:$0xff] %vm325, 0.0
          %364 = vst.msk [vmem:[#allocation2 + $0x128] sm:$0x3] %vm327, 0.0
          %365 = vst.msk [vmem:[#allocation2 + $0x130] sm:$0xff] %vm325, 0.0
          %366 = vst.msk [vmem:[#allocation2 + $0x138] sm:$0x3] %vm327, 0.0
          %v367 = vld [vmem:[%s0] sm:$0xff]
          %v368 = vld [vmem:[%s0 + $0x8] sm:$0xff]
          %v369 = vld [vmem:[%s0 + $0x10] sm:$0xff]
          %v370 = vld [vmem:[%s0 + $0x18] sm:$0xff]
          %v371 = vld [vmem:[%s0 + $0x20] sm:$0xff]
          %v372 = vld [vmem:[%s0 + $0x28] sm:$0xff]
          %v373 = vld [vmem:[%s0 + $0x30] sm:$0xff]
          %v374 = vld [vmem:[%s0 + $0x38] sm:$0xff]
          %v375 = vld [vmem:[%s0 + $0x40] sm:$0xff]
          %v376 = vld [vmem:[%s0 + $0x48] sm:$0xff]
          %v377 = vld [vmem:[%s0 + $0x50] sm:$0xff]
          %v378 = vld [vmem:[%s0 + $0x58] sm:$0xff]
          %v379 = vld [vmem:[%s0 + $0x60] sm:$0xff]
          %v380 = vld [vmem:[%s0 + $0x68] sm:$0xff]
          %v381 = vld [vmem:[%s0 + $0x70] sm:$0xff]
          %v382 = vld [vmem:[%s0 + $0x78] sm:$0xff]
          %s383 = scalar_lea.vmem [#allocation2], 16
          %384 = vst.msk [vmem:[%s383 + $0x1] sm:$0xff] %vm325, %v367
          %385 = vst.msk [vmem:[%s383 + $0x11] sm:$0xff] %vm325, %v368
          %386 = vst.msk [vmem:[%s383 + $0x21] sm:$0xff] %vm325, %v369
          %387 = vst.msk [vmem:[%s383 + $0x31] sm:$0xff] %vm325, %v370
          %388 = vst.msk [vmem:[%s383 + $0x41] sm:$0xff] %vm325, %v371
          %389 = vst.msk [vmem:[%s383 + $0x51] sm:$0xff] %vm325, %v372
          %390 = vst.msk [vmem:[%s383 + $0x61] sm:$0xff] %vm325, %v373
          %391 = vst.msk [vmem:[%s383 + $0x71] sm:$0xff] %vm325, %v374
          %392 = vst.msk [vmem:[%s383 + $0xa1] sm:$0xff] %vm325, %v375
          %393 = vst.msk [vmem:[%s383 + $0xb1] sm:$0xff] %vm325, %v376
          %394 = vst.msk [vmem:[%s383 + $0xc1] sm:$0xff] %vm325, %v377
          %395 = vst.msk [vmem:[%s383 + $0xd1] sm:$0xff] %vm325, %v378
          %396 = vst.msk [vmem:[%s383 + $0xe1] sm:$0xff] %vm325, %v379
          %397 = vst.msk [vmem:[%s383 + $0xf1] sm:$0xff] %vm325, %v380
          %398 = vst.msk [vmem:[%s383 + $0x101] sm:$0xff] %vm325, %v381
          %399 = vst.msk [vmem:[%s383 + $0x111] sm:$0xff] %vm325, %v382
          %400 = vst.msk [vmem:[#allocation4] sm:$0xff] %vm325, 0.0
          %401 = vst.msk [vmem:[#allocation4 + $0x8] sm:$0xff] %vm325, 0.0
          %402 = vst.msk [vmem:[#allocation4 + $0x10] sm:$0xff] %vm325, 0.0
          %403 = vst.msk [vmem:[#allocation4 + $0x18] sm:$0xff] %vm325, 0.0
          %404 = vst.msk [vmem:[#allocation4 + $0x20] sm:$0xff] %vm325, 0.0
          %405 = vst.msk [vmem:[#allocation4 + $0x28] sm:$0xff] %vm325, 0.0
          %406 = vst.msk [vmem:[#allocation4 + $0x30] sm:$0xff] %vm325, 0.0
          %407 = vst.msk [vmem:[#allocation4 + $0x38] sm:$0xff] %vm325, 0.0
          %408 = vst.msk [vmem:[#allocation4 + $0x40] sm:$0xff] %vm325, 0.0
          %409 = vst.msk [vmem:[#allocation4 + $0x48] sm:$0xff] %vm325, 0.0
          %410 = vst.msk [vmem:[#allocation4 + $0x50] sm:$0xff] %vm325, 0.0
          %411 = vst.msk [vmem:[#allocation4 + $0x58] sm:$0xff] %vm325, 0.0
          %412 = vst.msk [vmem:[#allocation4 + $0x60] sm:$0xff] %vm325, 0.0
          %413 = vst.msk [vmem:[#allocation4 + $0x68] sm:$0xff] %vm325, 0.0
          %414 = vst.msk [vmem:[#allocation4 + $0x70] sm:$0xff] %vm325, 0.0
          %415 = vst.msk [vmem:[#allocation4 + $0x78] sm:$0xff] %vm325, 0.0
        $region56: #{policy_net_forward.1} parent=51 // pred_fallthru
          _
        %v416 = vld [vmem:[#allocation2] sm:$0xff]
        %v417 = vld [vmem:[#allocation2 + $0x10] sm:$0xff]
        %v418 = vld [vmem:[#allocation2 + $0x20] sm:$0xff]
        %v419 = vld [vmem:[#allocation2 + $0x30] sm:$0xff]
        %v420 = vld [vmem:[#allocation2 + $0x40] sm:$0xff]
        %v421 = vld [vmem:[#allocation2 + $0x50] sm:$0xff]
        %v422 = vld [vmem:[#allocation2 + $0x60] sm:$0xff]
        %v423 = vld [vmem:[#allocation2 + $0x70] sm:$0xff]
        %v424 = vld [vmem:[#allocation2 + $0xa0] sm:$0xff]
        %v425 = vld [vmem:[#allocation2 + $0xb0] sm:$0xff]
        %v426 = vld [vmem:[#allocation2 + $0xc0] sm:$0xff]
        %v427 = vld [vmem:[#allocation2 + $0xd0] sm:$0xff]
        %v428 = vld [vmem:[#allocation2 + $0xe0] sm:$0xff]
        %v429 = vld [vmem:[#allocation2 + $0xf0] sm:$0xff]
        %v430 = vld [vmem:[#allocation2 + $0x100] sm:$0xff]
        %v431 = vld [vmem:[#allocation2 + $0x110] sm:$0xff]
        %v432 = vpack.c.bf16 %v416, %v416
        %v433 = vpack.c.bf16 %v417, %v417
        %v434 = vpack.c.bf16 %v418, %v418
        %v435 = vpack.c.bf16 %v419, %v419
        %v436 = vpack.c.bf16 %v420, %v420
        %v437 = vpack.c.bf16 %v421, %v421
        %v438 = vpack.c.bf16 %v422, %v422
        %v439 = vpack.c.bf16 %v423, %v423
        %v440 = vpack.c.bf16 %v424, %v424
        %v441 = vpack.c.bf16 %v425, %v425
        %v442 = vpack.c.bf16 %v426, %v426
        %v443 = vpack.c.bf16 %v427, %v427
        %v444 = vpack.c.bf16 %v428, %v428
        %v445 = vpack.c.bf16 %v429, %v429
        %v446 = vpack.c.bf16 %v430, %v430
        %v447 = vpack.c.bf16 %v431, %v431
        %vm448 = vcmask 257024
        %449 = vst.msk [vmem:[#allocation3] sm:$0xf] %vm448, %v432
        %450 = vst.msk [vmem:[#allocation3 + $0xc] sm:$0xf] %vm448, %v433
        %451 = vst.msk [vmem:[#allocation3 + $0x18] sm:$0xf] %vm448, %v434
        %452 = vst.msk [vmem:[#allocation3 + $0x24] sm:$0xf] %vm448, %v435
        %453 = vst.msk [vmem:[#allocation3 + $0x30] sm:$0xf] %vm448, %v436
        %454 = vst.msk [vmem:[#allocation3 + $0x3c] sm:$0xf] %vm448, %v437
        %455 = vst.msk [vmem:[#allocation3 + $0x48] sm:$0xf] %vm448, %v438
        %456 = vst.msk [vmem:[#allocation3 + $0x54] sm:$0xf] %vm448, %v439
        %457 = vst.msk [vmem:[#allocation3 + $0x60] sm:$0xf] %vm448, %v440
        %458 = vst.msk [vmem:[#allocation3 + $0x6c] sm:$0xf] %vm448, %v441
        %459 = vst.msk [vmem:[#allocation3 + $0x78] sm:$0xf] %vm448, %v442
        %460 = vst.msk [vmem:[#allocation3 + $0x84] sm:$0xf] %vm448, %v443
        %461 = vst.msk [vmem:[#allocation3 + $0x90] sm:$0xf] %vm448, %v444
        %462 = vst.msk [vmem:[#allocation3 + $0x9c] sm:$0xf] %vm448, %v445
        %463 = vst.msk [vmem:[#allocation3 + $0xa8] sm:$0xf] %vm448, %v446
        %464 = vst.msk [vmem:[#allocation3 + $0xb4] sm:$0xf] %vm448, %v447
        %v465 = vld [vmem:[#allocation2 + $0x1] sm:$0xff]
        %v466 = vld [vmem:[#allocation2 + $0x11] sm:$0xff]
        %v467 = vld [vmem:[#allocation2 + $0x21] sm:$0xff]
        %v468 = vld [vmem:[#allocation2 + $0x31] sm:$0xff]
        %v469 = vld [vmem:[#allocation2 + $0x41] sm:$0xff]
        %v470 = vld [vmem:[#allocation2 + $0x51] sm:$0xff]
        %v471 = vld [vmem:[#allocation2 + $0x61] sm:$0xff]
        %v472 = vld [vmem:[#allocation2 + $0x71] sm:$0xff]
        %v473 = vld [vmem:[#allocation2 + $0xa1] sm:$0xff]
        %v474 = vld [vmem:[#allocation2 + $0xb1] sm:$0xff]
        %v475 = vld [vmem:[#allocation2 + $0xc1] sm:$0xff]
        %v476 = vld [vmem:[#allocation2 + $0xd1] sm:$0xff]
        %v477 = vld [vmem:[#allocation2 + $0xe1] sm:$0xff]
        %v478 = vld [vmem:[#allocation2 + $0xf1] sm:$0xff]
        %v479 = vld [vmem:[#allocation2 + $0x101] sm:$0xff]
        %v480 = vld [vmem:[#allocation2 + $0x111] sm:$0xff]
        %v481 = vpack.c.bf16 %v465, %v465
        %v482 = vpack.c.bf16 %v466, %v466
        %v483 = vpack.c.bf16 %v467, %v467
        %v484 = vpack.c.bf16 %v468, %v468
        %v485 = vpack.c.bf16 %v469, %v469
        %v486 = vpack.c.bf16 %v470, %v470
        %v487 = vpack.c.bf16 %v471, %v471
        %v488 = vpack.c.bf16 %v472, %v472
        %v489 = vpack.c.bf16 %v473, %v473
        %v490 = vpack.c.bf16 %v474, %v474
        %v491 = vpack.c.bf16 %v475, %v475
        %v492 = vpack.c.bf16 %v476, %v476
        %v493 = vpack.c.bf16 %v477, %v477
        %v494 = vpack.c.bf16 %v478, %v478
        %v495 = vpack.c.bf16 %v479, %v479
        %v496 = vpack.c.bf16 %v480, %v480
        %513 = vrot.lane.b32.xlu0 %v481, 32
        %v514 = vpop.permute.xlu0 %513
        %515 = vrot.lane.b32.xlu0 %v482, 32
        %v516 = vpop.permute.xlu0 %515
        %517 = vrot.lane.b32.xlu0 %v483, 32
        %v518 = vpop.permute.xlu0 %517
        %519 = vrot.lane.b32.xlu0 %v484, 32
        %v520 = vpop.permute.xlu0 %519
        %521 = vrot.lane.b32.xlu0 %v485, 32
        %v522 = vpop.permute.xlu0 %521
        %523 = vrot.lane.b32.xlu0 %v486, 32
        %v524 = vpop.permute.xlu0 %523
        %525 = vrot.lane.b32.xlu0 %v487, 32
        %v526 = vpop.permute.xlu0 %525
        %527 = vrot.lane.b32.xlu0 %v488, 32
        %v528 = vpop.permute.xlu0 %527
        %529 = vrot.lane.b32.xlu0 %v489, 32
        %v530 = vpop.permute.xlu0 %529
        %531 = vrot.lane.b32.xlu0 %v490, 32
        %v532 = vpop.permute.xlu0 %531
        %533 = vrot.lane.b32.xlu0 %v491, 32
        %v534 = vpop.permute.xlu0 %533
        %535 = vrot.lane.b32.xlu0 %v492, 32
        %v536 = vpop.permute.xlu0 %535
        %537 = vrot.lane.b32.xlu0 %v493, 32
        %v538 = vpop.permute.xlu0 %537
        %539 = vrot.lane.b32.xlu0 %v494, 32
        %v540 = vpop.permute.xlu0 %539
        %541 = vrot.lane.b32.xlu0 %v495, 32
        %v542 = vpop.permute.xlu0 %541
        %543 = vrot.lane.b32.xlu0 %v496, 32
        %v544 = vpop.permute.xlu0 %543
        %vm561 = vcmask 519424
        %562 = vst.msk [vmem:[#allocation3] sm:$0xf] %vm561, %v514
        %563 = vst.msk [vmem:[#allocation3 + $0xc] sm:$0xf] %vm561, %v516
        %564 = vst.msk [vmem:[#allocation3 + $0x18] sm:$0xf] %vm561, %v518
        %565 = vst.msk [vmem:[#allocation3 + $0x24] sm:$0xf] %vm561, %v520
        %566 = vst.msk [vmem:[#allocation3 + $0x30] sm:$0xf] %vm561, %v522
        %567 = vst.msk [vmem:[#allocation3 + $0x3c] sm:$0xf] %vm561, %v524
        %568 = vst.msk [vmem:[#allocation3 + $0x48] sm:$0xf] %vm561, %v526
        %569 = vst.msk [vmem:[#allocation3 + $0x54] sm:$0xf] %vm561, %v528
        %570 = vst.msk [vmem:[#allocation3 + $0x60] sm:$0xf] %vm561, %v530
        %571 = vst.msk [vmem:[#allocation3 + $0x6c] sm:$0xf] %vm561, %v532
        %572 = vst.msk [vmem:[#allocation3 + $0x78] sm:$0xf] %vm561, %v534
        %573 = vst.msk [vmem:[#allocation3 + $0x84] sm:$0xf] %vm561, %v536
        %574 = vst.msk [vmem:[#allocation3 + $0x90] sm:$0xf] %vm561, %v538
        %575 = vst.msk [vmem:[#allocation3 + $0x9c] sm:$0xf] %vm561, %v540
        %576 = vst.msk [vmem:[#allocation3 + $0xa8] sm:$0xf] %vm561, %v542
        %577 = vst.msk [vmem:[#allocation3 + $0xb4] sm:$0xf] %vm561, %v544
        %v578 = vld [vmem:[#allocation2 + $0x2] sm:$0xff]
        %v579 = vld [vmem:[#allocation2 + $0x12] sm:$0xff]
        %v580 = vld [vmem:[#allocation2 + $0x22] sm:$0xff]
        %v581 = vld [vmem:[#allocation2 + $0x32] sm:$0xff]
        %v582 = vld [vmem:[#allocation2 + $0x42] sm:$0xff]
        %v583 = vld [vmem:[#allocation2 + $0x52] sm:$0xff]
        %v584 = vld [vmem:[#allocation2 + $0x62] sm:$0xff]
        %v585 = vld [vmem:[#allocation2 + $0x72] sm:$0xff]
        %v586 = vld [vmem:[#allocation2 + $0xa2] sm:$0xff]
        %v587 = vld [vmem:[#allocation2 + $0xb2] sm:$0xff]
        %v588 = vld [vmem:[#allocation2 + $0xc2] sm:$0xff]
        %v589 = vld [vmem:[#allocation2 + $0xd2] sm:$0xff]
        %v590 = vld [vmem:[#allocation2 + $0xe2] sm:$0xff]
        %v591 = vld [vmem:[#allocation2 + $0xf2] sm:$0xff]
        %v592 = vld [vmem:[#allocation2 + $0x102] sm:$0xff]
        %v593 = vld [vmem:[#allocation2 + $0x112] sm:$0xff]
        %v594 = vpack.c.bf16 %v578, %v578
        %v595 = vpack.c.bf16 %v579, %v579
        %v596 = vpack.c.bf16 %v580, %v580
        %v597 = vpack.c.bf16 %v581, %v581
        %v598 = vpack.c.bf16 %v582, %v582
        %v599 = vpack.c.bf16 %v583, %v583
        %v600 = vpack.c.bf16 %v584, %v584
        %v601 = vpack.c.bf16 %v585, %v585
        %v602 = vpack.c.bf16 %v586, %v586
        %v603 = vpack.c.bf16 %v587, %v587
        %v604 = vpack.c.bf16 %v588, %v588
        %v605 = vpack.c.bf16 %v589, %v589
        %v606 = vpack.c.bf16 %v590, %v590
        %v607 = vpack.c.bf16 %v591, %v591
        %v608 = vpack.c.bf16 %v592, %v592
        %v609 = vpack.c.bf16 %v593, %v593
        %626 = vrot.lane.b32.xlu0 %v594, 64
        %v627 = vpop.permute.xlu0 %626
        %628 = vrot.lane.b32.xlu0 %v595, 64
        %v629 = vpop.permute.xlu0 %628
        %630 = vrot.lane.b32.xlu0 %v596, 64
        %v631 = vpop.permute.xlu0 %630
        %632 = vrot.lane.b32.xlu0 %v597, 64
        %v633 = vpop.permute.xlu0 %632
        %634 = vrot.lane.b32.xlu0 %v598, 64
        %v635 = vpop.permute.xlu0 %634
        %636 = vrot.lane.b32.xlu0 %v599, 64
        %v637 = vpop.permute.xlu0 %636
        %638 = vrot.lane.b32.xlu0 %v600, 64
        %v639 = vpop.permute.xlu0 %638
        %640 = vrot.lane.b32.xlu0 %v601, 64
        %v641 = vpop.permute.xlu0 %640
        %642 = vrot.lane.b32.xlu0 %v602, 64
        %v643 = vpop.permute.xlu0 %642
        %644 = vrot.lane.b32.xlu0 %v603, 64
        %v645 = vpop.permute.xlu0 %644
        %646 = vrot.lane.b32.xlu0 %v604, 64
        %v647 = vpop.permute.xlu0 %646
        %648 = vrot.lane.b32.xlu0 %v605, 64
        %v649 = vpop.permute.xlu0 %648
        %650 = vrot.lane.b32.xlu0 %v606, 64
        %v651 = vpop.permute.xlu0 %650
        %652 = vrot.lane.b32.xlu0 %v607, 64
        %v653 = vpop.permute.xlu0 %652
        %654 = vrot.lane.b32.xlu0 %v608, 64
        %v655 = vpop.permute.xlu0 %654
        %656 = vrot.lane.b32.xlu0 %v609, 64
        %v657 = vpop.permute.xlu0 %656
        %vm674 = vcmask 781824
        %675 = vst.msk [vmem:[#allocation3] sm:$0xf] %vm674, %v627
        %676 = vst.msk [vmem:[#allocation3 + $0xc] sm:$0xf] %vm674, %v629
        %677 = vst.msk [vmem:[#allocation3 + $0x18] sm:$0xf] %vm674, %v631
        %678 = vst.msk [vmem:[#allocation3 + $0x24] sm:$0xf] %vm674, %v633
        %679 = vst.msk [vmem:[#allocation3 + $0x30] sm:$0xf] %vm674, %v635
        %680 = vst.msk [vmem:[#allocation3 + $0x3c] sm:$0xf] %vm674, %v637
        %681 = vst.msk [vmem:[#allocation3 + $0x48] sm:$0xf] %vm674, %v639
        %682 = vst.msk [vmem:[#allocation3 + $0x54] sm:$0xf] %vm674, %v641
        %683 = vst.msk [vmem:[#allocation3 + $0x60] sm:$0xf] %vm674, %v643
        %684 = vst.msk [vmem:[#allocation3 + $0x6c] sm:$0xf] %vm674, %v645
        %685 = vst.msk [vmem:[#allocation3 + $0x78] sm:$0xf] %vm674, %v647
        %686 = vst.msk [vmem:[#allocation3 + $0x84] sm:$0xf] %vm674, %v649
        %687 = vst.msk [vmem:[#allocation3 + $0x90] sm:$0xf] %vm674, %v651
        %688 = vst.msk [vmem:[#allocation3 + $0x9c] sm:$0xf] %vm674, %v653
        %689 = vst.msk [vmem:[#allocation3 + $0xa8] sm:$0xf] %vm674, %v655
        %690 = vst.msk [vmem:[#allocation3 + $0xb4] sm:$0xf] %vm674, %v657
        %s691 = scalar_lea.vmem [#allocation2], 16
        %v692 = vld [vmem:[%s691] sm:$0xff]
        %v693 = vld [vmem:[%s691 + $0x10] sm:$0xff]
        %v694 = vld [vmem:[%s691 + $0x20] sm:$0xff]
        %v695 = vld [vmem:[%s691 + $0x30] sm:$0xff]
        %v696 = vld [vmem:[%s691 + $0x40] sm:$0xff]
        %v697 = vld [vmem:[%s691 + $0x50] sm:$0xff]
        %v698 = vld [vmem:[%s691 + $0x60] sm:$0xff]
        %v699 = vld [vmem:[%s691 + $0x70] sm:$0xff]
        %v700 = vld [vmem:[%s691 + $0xa0] sm:$0xff]
        %v701 = vld [vmem:[%s691 + $0xb0] sm:$0xff]
        %v702 = vld [vmem:[%s691 + $0xc0] sm:$0xff]
        %v703 = vld [vmem:[%s691 + $0xd0] sm:$0xff]
        %v704 = vld [vmem:[%s691 + $0xe0] sm:$0xff]
        %v705 = vld [vmem:[%s691 + $0xf0] sm:$0xff]
        %v706 = vld [vmem:[%s691 + $0x100] sm:$0xff]
        %v707 = vld [vmem:[%s691 + $0x110] sm:$0xff]
        %v708 = vpack.c.bf16 %v692, %v692
        %v709 = vpack.c.bf16 %v693, %v693
        %v710 = vpack.c.bf16 %v694, %v694
        %v711 = vpack.c.bf16 %v695, %v695
        %v712 = vpack.c.bf16 %v696, %v696
        %v713 = vpack.c.bf16 %v697, %v697
        %v714 = vpack.c.bf16 %v698, %v698
        %v715 = vpack.c.bf16 %v699, %v699
        %v716 = vpack.c.bf16 %v700, %v700
        %v717 = vpack.c.bf16 %v701, %v701
        %v718 = vpack.c.bf16 %v702, %v702
        %v719 = vpack.c.bf16 %v703, %v703
        %v720 = vpack.c.bf16 %v704, %v704
        %v721 = vpack.c.bf16 %v705, %v705
        %v722 = vpack.c.bf16 %v706, %v706
        %v723 = vpack.c.bf16 %v707, %v707
        %740 = vrot.lane.b32.xlu0 %v708, 96
        %v741 = vpop.permute.xlu0 %740
        %742 = vrot.lane.b32.xlu0 %v709, 96
        %v743 = vpop.permute.xlu0 %742
        %744 = vrot.lane.b32.xlu0 %v710, 96
        %v745 = vpop.permute.xlu0 %744
        %746 = vrot.lane.b32.xlu0 %v711, 96
        %v747 = vpop.permute.xlu0 %746
        %748 = vrot.lane.b32.xlu0 %v712, 96
        %v749 = vpop.permute.xlu0 %748
        %750 = vrot.lane.b32.xlu0 %v713, 96
        %v751 = vpop.permute.xlu0 %750
        %752 = vrot.lane.b32.xlu0 %v714, 96
        %v753 = vpop.permute.xlu0 %752
        %754 = vrot.lane.b32.xlu0 %v715, 96
        %v755 = vpop.permute.xlu0 %754
        %756 = vrot.lane.b32.xlu0 %v716, 96
        %v757 = vpop.permute.xlu0 %756
        %758 = vrot.lane.b32.xlu0 %v717, 96
        %v759 = vpop.permute.xlu0 %758
        %760 = vrot.lane.b32.xlu0 %v718, 96
        %v761 = vpop.permute.xlu0 %760
        %762 = vrot.lane.b32.xlu0 %v719, 96
        %v763 = vpop.permute.xlu0 %762
        %764 = vrot.lane.b32.xlu0 %v720, 96
        %v765 = vpop.permute.xlu0 %764
        %766 = vrot.lane.b32.xlu0 %v721, 96
        %v767 = vpop.permute.xlu0 %766
        %768 = vrot.lane.b32.xlu0 %v722, 96
        %v769 = vpop.permute.xlu0 %768
        %770 = vrot.lane.b32.xlu0 %v723, 96
        %v771 = vpop.permute.xlu0 %770
        %vm788 = vcmask 1044224
        %789 = vst.msk [vmem:[#allocation3] sm:$0xf] %vm788, %v741
        %790 = vst.msk [vmem:[#allocation3 + $0xc] sm:$0xf] %vm788, %v743
        %791 = vst.msk [vmem:[#allocation3 + $0x18] sm:$0xf] %vm788, %v745
        %792 = vst.msk [vmem:[#allocation3 + $0x24] sm:$0xf] %vm788, %v747
        %793 = vst.msk [vmem:[#allocation3 + $0x30] sm:$0xf] %vm788, %v749
        %794 = vst.msk [vmem:[#allocation3 + $0x3c] sm:$0xf] %vm788, %v751
        %795 = vst.msk [vmem:[#allocation3 + $0x48] sm:$0xf] %vm788, %v753
        %796 = vst.msk [vmem:[#allocation3 + $0x54] sm:$0xf] %vm788, %v755
        %797 = vst.msk [vmem:[#allocation3 + $0x60] sm:$0xf] %vm788, %v757
        %798 = vst.msk [vmem:[#allocation3 + $0x6c] sm:$0xf] %vm788, %v759
        %799 = vst.msk [vmem:[#allocation3 + $0x78] sm:$0xf] %vm788, %v761
        %800 = vst.msk [vmem:[#allocation3 + $0x84] sm:$0xf] %vm788, %v763
        %801 = vst.msk [vmem:[#allocation3 + $0x90] sm:$0xf] %vm788, %v765
        %802 = vst.msk [vmem:[#allocation3 + $0x9c] sm:$0xf] %vm788, %v767
        %803 = vst.msk [vmem:[#allocation3 + $0xa8] sm:$0xf] %vm788, %v769
        %804 = vst.msk [vmem:[#allocation3 + $0xb4] sm:$0xf] %vm788, %v771
        %v805 = vld [vmem:[%s691 + $0x1] sm:$0xff]
        %v806 = vld [vmem:[%s691 + $0x11] sm:$0xff]
        %v807 = vld [vmem:[%s691 + $0x21] sm:$0xff]
        %v808 = vld [vmem:[%s691 + $0x31] sm:$0xff]
        %v809 = vld [vmem:[%s691 + $0x41] sm:$0xff]
        %v810 = vld [vmem:[%s691 + $0x51] sm:$0xff]
        %v811 = vld [vmem:[%s691 + $0x61] sm:$0xff]
        %v812 = vld [vmem:[%s691 + $0x71] sm:$0xff]
        %v813 = vld [vmem:[%s691 + $0xa1] sm:$0xff]
        %v814 = vld [vmem:[%s691 + $0xb1] sm:$0xff]
        %v815 = vld [vmem:[%s691 + $0xc1] sm:$0xff]
        %v816 = vld [vmem:[%s691 + $0xd1] sm:$0xff]
        %v817 = vld [vmem:[%s691 + $0xe1] sm:$0xff]
        %v818 = vld [vmem:[%s691 + $0xf1] sm:$0xff]
        %v819 = vld [vmem:[%s691 + $0x101] sm:$0xff]
        %v820 = vld [vmem:[%s691 + $0x111] sm:$0xff]
        %v821 = vpack.c.bf16 %v805, %v805
        %v822 = vpack.c.bf16 %v806, %v806
        %v823 = vpack.c.bf16 %v807, %v807
        %v824 = vpack.c.bf16 %v808, %v808
        %v825 = vpack.c.bf16 %v809, %v809
        %v826 = vpack.c.bf16 %v810, %v810
        %v827 = vpack.c.bf16 %v811, %v811
        %v828 = vpack.c.bf16 %v812, %v812
        %v829 = vpack.c.bf16 %v813, %v813
        %v830 = vpack.c.bf16 %v814, %v814
        %v831 = vpack.c.bf16 %v815, %v815
        %v832 = vpack.c.bf16 %v816, %v816
        %v833 = vpack.c.bf16 %v817, %v817
        %v834 = vpack.c.bf16 %v818, %v818
        %v835 = vpack.c.bf16 %v819, %v819
        %v836 = vpack.c.bf16 %v820, %v820
        %837 = vst.msk [vmem:[#allocation3 + $0x4] sm:$0xf] %vm448, %v821
        %838 = vst.msk [vmem:[#allocation3 + $0x10] sm:$0xf] %vm448, %v822
        %839 = vst.msk [vmem:[#allocation3 + $0x1c] sm:$0xf] %vm448, %v823
        %840 = vst.msk [vmem:[#allocation3 + $0x28] sm:$0xf] %vm448, %v824
        %841 = vst.msk [vmem:[#allocation3 + $0x34] sm:$0xf] %vm448, %v825
        %842 = vst.msk [vmem:[#allocation3 + $0x40] sm:$0xf] %vm448, %v826
        %843 = vst.msk [vmem:[#allocation3 + $0x4c] sm:$0xf] %vm448, %v827
        %844 = vst.msk [vmem:[#allocation3 + $0x58] sm:$0xf] %vm448, %v828
        %845 = vst.msk [vmem:[#allocation3 + $0x64] sm:$0xf] %vm448, %v829
        %846 = vst.msk [vmem:[#allocation3 + $0x70] sm:$0xf] %vm448, %v830
        %847 = vst.msk [vmem:[#allocation3 + $0x7c] sm:$0xf] %vm448, %v831
        %848 = vst.msk [vmem:[#allocation3 + $0x88] sm:$0xf] %vm448, %v832
        %849 = vst.msk [vmem:[#allocation3 + $0x94] sm:$0xf] %vm448, %v833
        %850 = vst.msk [vmem:[#allocation3 + $0xa0] sm:$0xf] %vm448, %v834
        %851 = vst.msk [vmem:[#allocation3 + $0xac] sm:$0xf] %vm448, %v835
        %852 = vst.msk [vmem:[#allocation3 + $0xb8] sm:$0xf] %vm448, %v836
        %v853 = vld [vmem:[%s691 + $0x2] sm:$0xff]
        %v854 = vld [vmem:[%s691 + $0x12] sm:$0xff]
        %v855 = vld [vmem:[%s691 + $0x22] sm:$0xff]
        %v856 = vld [vmem:[%s691 + $0x32] sm:$0xff]
        %v857 = vld [vmem:[%s691 + $0x42] sm:$0xff]
        %v858 = vld [vmem:[%s691 + $0x52] sm:$0xff]
        %v859 = vld [vmem:[%s691 + $0x62] sm:$0xff]
        %v860 = vld [vmem:[%s691 + $0x72] sm:$0xff]
        %v861 = vld [vmem:[%s691 + $0xa2] sm:$0xff]
        %v862 = vld [vmem:[%s691 + $0xb2] sm:$0xff]
        %v863 = vld [vmem:[%s691 + $0xc2] sm:$0xff]
        %v864 = vld [vmem:[%s691 + $0xd2] sm:$0xff]
        %v865 = vld [vmem:[%s691 + $0xe2] sm:$0xff]
        %v866 = vld [vmem:[%s691 + $0xf2] sm:$0xff]
        %v867 = vld [vmem:[%s691 + $0x102] sm:$0xff]
        %v868 = vld [vmem:[%s691 + $0x112] sm:$0xff]
        %v869 = vpack.c.bf16 %v853, %v853
        %v870 = vpack.c.bf16 %v854, %v854
        %v871 = vpack.c.bf16 %v855, %v855
        %v872 = vpack.c.bf16 %v856, %v856
        %v873 = vpack.c.bf16 %v857, %v857
        %v874 = vpack.c.bf16 %v858, %v858
        %v875 = vpack.c.bf16 %v859, %v859
        %v876 = vpack.c.bf16 %v860, %v860
        %v877 = vpack.c.bf16 %v861, %v861
        %v878 = vpack.c.bf16 %v862, %v862
        %v879 = vpack.c.bf16 %v863, %v863
        %v880 = vpack.c.bf16 %v864, %v864
        %v881 = vpack.c.bf16 %v865, %v865
        %v882 = vpack.c.bf16 %v866, %v866
        %v883 = vpack.c.bf16 %v867, %v867
        %v884 = vpack.c.bf16 %v868, %v868
        %901 = vrot.lane.b32.xlu0 %v869, 32
        %v902 = vpop.permute.xlu0 %901
        %903 = vrot.lane.b32.xlu0 %v870, 32
        %v904 = vpop.permute.xlu0 %903
        %905 = vrot.lane.b32.xlu0 %v871, 32
        %v906 = vpop.permute.xlu0 %905
        %907 = vrot.lane.b32.xlu0 %v872, 32
        %v908 = vpop.permute.xlu0 %907
        %909 = vrot.lane.b32.xlu0 %v873, 32
        %v910 = vpop.permute.xlu0 %909
        %911 = vrot.lane.b32.xlu0 %v874, 32
        %v912 = vpop.permute.xlu0 %911
        %913 = vrot.lane.b32.xlu0 %v875, 32
        %v914 = vpop.permute.xlu0 %913
        %915 = vrot.lane.b32.xlu0 %v876, 32
        %v916 = vpop.permute.xlu0 %915
        %917 = vrot.lane.b32.xlu0 %v877, 32
        %v918 = vpop.permute.xlu0 %917
        %919 = vrot.lane.b32.xlu0 %v878, 32
        %v920 = vpop.permute.xlu0 %919
        %921 = vrot.lane.b32.xlu0 %v879, 32
        %v922 = vpop.permute.xlu0 %921
        %923 = vrot.lane.b32.xlu0 %v880, 32
        %v924 = vpop.permute.xlu0 %923
        %925 = vrot.lane.b32.xlu0 %v881, 32
        %v926 = vpop.permute.xlu0 %925
        %927 = vrot.lane.b32.xlu0 %v882, 32
        %v928 = vpop.permute.xlu0 %927
        %929 = vrot.lane.b32.xlu0 %v883, 32
        %v930 = vpop.permute.xlu0 %929
        %931 = vrot.lane.b32.xlu0 %v884, 32
        %v932 = vpop.permute.xlu0 %931
        %949 = vst.msk [vmem:[#allocation3 + $0x4] sm:$0xf] %vm561, %v902
        %950 = vst.msk [vmem:[#allocation3 + $0x10] sm:$0xf] %vm561, %v904
        %951 = vst.msk [vmem:[#allocation3 + $0x1c] sm:$0xf] %vm561, %v906
        %952 = vst.msk [vmem:[#allocation3 + $0x28] sm:$0xf] %vm561, %v908
        %953 = vst.msk [vmem:[#allocation3 + $0x34] sm:$0xf] %vm561, %v910
        %954 = vst.msk [vmem:[#allocation3 + $0x40] sm:$0xf] %vm561, %v912
        %955 = vst.msk [vmem:[#allocation3 + $0x4c] sm:$0xf] %vm561, %v914
        %956 = vst.msk [vmem:[#allocation3 + $0x58] sm:$0xf] %vm561, %v916
        %957 = vst.msk [vmem:[#allocation3 + $0x64] sm:$0xf] %vm561, %v918
        %958 = vst.msk [vmem:[#allocation3 + $0x70] sm:$0xf] %vm561, %v920
        %959 = vst.msk [vmem:[#allocation3 + $0x7c] sm:$0xf] %vm561, %v922
        %960 = vst.msk [vmem:[#allocation3 + $0x88] sm:$0xf] %vm561, %v924
        %961 = vst.msk [vmem:[#allocation3 + $0x94] sm:$0xf] %vm561, %v926
        %962 = vst.msk [vmem:[#allocation3 + $0xa0] sm:$0xf] %vm561, %v928
        %963 = vst.msk [vmem:[#allocation3 + $0xac] sm:$0xf] %vm561, %v930
        %964 = vst.msk [vmem:[#allocation3 + $0xb8] sm:$0xf] %vm561, %v932
        %s965 = scalar_lea.vmem [#allocation2], 32
        %v966 = vld [vmem:[%s965] sm:$0xff]
        %v967 = vld [vmem:[%s965 + $0x10] sm:$0xff]
        %v968 = vld [vmem:[%s965 + $0x20] sm:$0xff]
        %v969 = vld [vmem:[%s965 + $0x30] sm:$0xff]
        %v970 = vld [vmem:[%s965 + $0x40] sm:$0xff]
        %v971 = vld [vmem:[%s965 + $0x50] sm:$0xff]
        %v972 = vld [vmem:[%s965 + $0x60] sm:$0xff]
        %v973 = vld [vmem:[%s965 + $0x70] sm:$0xff]
        %v974 = vld [vmem:[%s965 + $0xa0] sm:$0xff]
        %v975 = vld [vmem:[%s965 + $0xb0] sm:$0xff]
        %v976 = vld [vmem:[%s965 + $0xc0] sm:$0xff]
        %v977 = vld [vmem:[%s965 + $0xd0] sm:$0xff]
        %v978 = vld [vmem:[%s965 + $0xe0] sm:$0xff]
        %v979 = vld [vmem:[%s965 + $0xf0] sm:$0xff]
        %v980 = vld [vmem:[%s965 + $0x100] sm:$0xff]
        %v981 = vld [vmem:[%s965 + $0x110] sm:$0xff]
        %v982 = vpack.c.bf16 %v966, %v966
        %v983 = vpack.c.bf16 %v967, %v967
        %v984 = vpack.c.bf16 %v968, %v968
        %v985 = vpack.c.bf16 %v969, %v969
        %v986 = vpack.c.bf16 %v970, %v970
        %v987 = vpack.c.bf16 %v971, %v971
        %v988 = vpack.c.bf16 %v972, %v972
        %v989 = vpack.c.bf16 %v973, %v973
        %v990 = vpack.c.bf16 %v974, %v974
        %v991 = vpack.c.bf16 %v975, %v975
        %v992 = vpack.c.bf16 %v976, %v976
        %v993 = vpack.c.bf16 %v977, %v977
        %v994 = vpack.c.bf16 %v978, %v978
        %v995 = vpack.c.bf16 %v979, %v979
        %v996 = vpack.c.bf16 %v980, %v980
        %v997 = vpack.c.bf16 %v981, %v981
        %1014 = vrot.lane.b32.xlu0 %v982, 64
        %v1015 = vpop.permute.xlu0 %1014
        %1016 = vrot.lane.b32.xlu0 %v983, 64
        %v1017 = vpop.permute.xlu0 %1016
        %1018 = vrot.lane.b32.xlu0 %v984, 64
        %v1019 = vpop.permute.xlu0 %1018
        %1020 = vrot.lane.b32.xlu0 %v985, 64
        %v1021 = vpop.permute.xlu0 %1020
        %1022 = vrot.lane.b32.xlu0 %v986, 64
        %v1023 = vpop.permute.xlu0 %1022
        %1024 = vrot.lane.b32.xlu0 %v987, 64
        %v1025 = vpop.permute.xlu0 %1024
        %1026 = vrot.lane.b32.xlu0 %v988, 64
        %v1027 = vpop.permute.xlu0 %1026
        %1028 = vrot.lane.b32.xlu0 %v989, 64
        %v1029 = vpop.permute.xlu0 %1028
        %1030 = vrot.lane.b32.xlu0 %v990, 64
        %v1031 = vpop.permute.xlu0 %1030
        %1032 = vrot.lane.b32.xlu0 %v991, 64
        %v1033 = vpop.permute.xlu0 %1032
        %1034 = vrot.lane.b32.xlu0 %v992, 64
        %v1035 = vpop.permute.xlu0 %1034
        %1036 = vrot.lane.b32.xlu0 %v993, 64
        %v1037 = vpop.permute.xlu0 %1036
        %1038 = vrot.lane.b32.xlu0 %v994, 64
        %v1039 = vpop.permute.xlu0 %1038
        %1040 = vrot.lane.b32.xlu0 %v995, 64
        %v1041 = vpop.permute.xlu0 %1040
        %1042 = vrot.lane.b32.xlu0 %v996, 64
        %v1043 = vpop.permute.xlu0 %1042
        %1044 = vrot.lane.b32.xlu0 %v997, 64
        %v1045 = vpop.permute.xlu0 %1044
        %1062 = vst.msk [vmem:[#allocation3 + $0x4] sm:$0xf] %vm674, %v1015
        %1063 = vst.msk [vmem:[#allocation3 + $0x10] sm:$0xf] %vm674, %v1017
        %1064 = vst.msk [vmem:[#allocation3 + $0x1c] sm:$0xf] %vm674, %v1019
        %1065 = vst.msk [vmem:[#allocation3 + $0x28] sm:$0xf] %vm674, %v1021
        %1066 = vst.msk [vmem:[#allocation3 + $0x34] sm:$0xf] %vm674, %v1023
        %1067 = vst.msk [vmem:[#allocation3 + $0x40] sm:$0xf] %vm674, %v1025
        %1068 = vst.msk [vmem:[#allocation3 + $0x4c] sm:$0xf] %vm674, %v1027
        %1069 = vst.msk [vmem:[#allocation3 + $0x58] sm:$0xf] %vm674, %v1029
        %1070 = vst.msk [vmem:[#allocation3 + $0x64] sm:$0xf] %vm674, %v1031
        %1071 = vst.msk [vmem:[#allocation3 + $0x70] sm:$0xf] %vm674, %v1033
        %1072 = vst.msk [vmem:[#allocation3 + $0x7c] sm:$0xf] %vm674, %v1035
        %1073 = vst.msk [vmem:[#allocation3 + $0x88] sm:$0xf] %vm674, %v1037
        %1074 = vst.msk [vmem:[#allocation3 + $0x94] sm:$0xf] %vm674, %v1039
        %1075 = vst.msk [vmem:[#allocation3 + $0xa0] sm:$0xf] %vm674, %v1041
        %1076 = vst.msk [vmem:[#allocation3 + $0xac] sm:$0xf] %vm674, %v1043
        %1077 = vst.msk [vmem:[#allocation3 + $0xb8] sm:$0xf] %vm674, %v1045
        %v1078 = vld [vmem:[%s965 + $0x1] sm:$0xff]
        %v1079 = vld [vmem:[%s965 + $0x11] sm:$0xff]
        %v1080 = vld [vmem:[%s965 + $0x21] sm:$0xff]
        %v1081 = vld [vmem:[%s965 + $0x31] sm:$0xff]
        %v1082 = vld [vmem:[%s965 + $0x41] sm:$0xff]
        %v1083 = vld [vmem:[%s965 + $0x51] sm:$0xff]
        %v1084 = vld [vmem:[%s965 + $0x61] sm:$0xff]
        %v1085 = vld [vmem:[%s965 + $0x71] sm:$0xff]
        %v1086 = vld [vmem:[%s965 + $0xa1] sm:$0xff]
        %v1087 = vld [vmem:[%s965 + $0xb1] sm:$0xff]
        %v1088 = vld [vmem:[%s965 + $0xc1] sm:$0xff]
        %v1089 = vld [vmem:[%s965 + $0xd1] sm:$0xff]
        %v1090 = vld [vmem:[%s965 + $0xe1] sm:$0xff]
        %v1091 = vld [vmem:[%s965 + $0xf1] sm:$0xff]
        %v1092 = vld [vmem:[%s965 + $0x101] sm:$0xff]
        %v1093 = vld [vmem:[%s965 + $0x111] sm:$0xff]
        %v1094 = vpack.c.bf16 %v1078, %v1078
        %v1095 = vpack.c.bf16 %v1079, %v1079
        %v1096 = vpack.c.bf16 %v1080, %v1080
        %v1097 = vpack.c.bf16 %v1081, %v1081
        %v1098 = vpack.c.bf16 %v1082, %v1082
        %v1099 = vpack.c.bf16 %v1083, %v1083
        %v1100 = vpack.c.bf16 %v1084, %v1084
        %v1101 = vpack.c.bf16 %v1085, %v1085
        %v1102 = vpack.c.bf16 %v1086, %v1086
        %v1103 = vpack.c.bf16 %v1087, %v1087
        %v1104 = vpack.c.bf16 %v1088, %v1088
        %v1105 = vpack.c.bf16 %v1089, %v1089
        %v1106 = vpack.c.bf16 %v1090, %v1090
        %v1107 = vpack.c.bf16 %v1091, %v1091
        %v1108 = vpack.c.bf16 %v1092, %v1092
        %v1109 = vpack.c.bf16 %v1093, %v1093
        %1126 = vrot.lane.b32.xlu0 %v1094, 96
        %v1127 = vpop.permute.xlu0 %1126
        %1128 = vrot.lane.b32.xlu0 %v1095, 96
        %v1129 = vpop.permute.xlu0 %1128
        %1130 = vrot.lane.b32.xlu0 %v1096, 96
        %v1131 = vpop.permute.xlu0 %1130
        %1132 = vrot.lane.b32.xlu0 %v1097, 96
        %v1133 = vpop.permute.xlu0 %1132
        %1134 = vrot.lane.b32.xlu0 %v1098, 96
        %v1135 = vpop.permute.xlu0 %1134
        %1136 = vrot.lane.b32.xlu0 %v1099, 96
        %v1137 = vpop.permute.xlu0 %1136
        %1138 = vrot.lane.b32.xlu0 %v1100, 96
        %v1139 = vpop.permute.xlu0 %1138
        %1140 = vrot.lane.b32.xlu0 %v1101, 96
        %v1141 = vpop.permute.xlu0 %1140
        %1142 = vrot.lane.b32.xlu0 %v1102, 96
        %v1143 = vpop.permute.xlu0 %1142
        %1144 = vrot.lane.b32.xlu0 %v1103, 96
        %v1145 = vpop.permute.xlu0 %1144
        %1146 = vrot.lane.b32.xlu0 %v1104, 96
        %v1147 = vpop.permute.xlu0 %1146
        %1148 = vrot.lane.b32.xlu0 %v1105, 96
        %v1149 = vpop.permute.xlu0 %1148
        %1150 = vrot.lane.b32.xlu0 %v1106, 96
        %v1151 = vpop.permute.xlu0 %1150
        %1152 = vrot.lane.b32.xlu0 %v1107, 96
        %v1153 = vpop.permute.xlu0 %1152
        %1154 = vrot.lane.b32.xlu0 %v1108, 96
        %v1155 = vpop.permute.xlu0 %1154
        %1156 = vrot.lane.b32.xlu0 %v1109, 96
        %v1157 = vpop.permute.xlu0 %1156
        %1174 = vst.msk [vmem:[#allocation3 + $0x4] sm:$0xf] %vm788, %v1127
        %1175 = vst.msk [vmem:[#allocation3 + $0x10] sm:$0xf] %vm788, %v1129
        %1176 = vst.msk [vmem:[#allocation3 + $0x1c] sm:$0xf] %vm788, %v1131
        %1177 = vst.msk [vmem:[#allocation3 + $0x28] sm:$0xf] %vm788, %v1133
        %1178 = vst.msk [vmem:[#allocation3 + $0x34] sm:$0xf] %vm788, %v1135
        %1179 = vst.msk [vmem:[#allocation3 + $0x40] sm:$0xf] %vm788, %v1137
        %1180 = vst.msk [vmem:[#allocation3 + $0x4c] sm:$0xf] %vm788, %v1139
        %1181 = vst.msk [vmem:[#allocation3 + $0x58] sm:$0xf] %vm788, %v1141
        %1182 = vst.msk [vmem:[#allocation3 + $0x64] sm:$0xf] %vm788, %v1143
        %1183 = vst.msk [vmem:[#allocation3 + $0x70] sm:$0xf] %vm788, %v1145
        %1184 = vst.msk [vmem:[#allocation3 + $0x7c] sm:$0xf] %vm788, %v1147
        %1185 = vst.msk [vmem:[#allocation3 + $0x88] sm:$0xf] %vm788, %v1149
        %1186 = vst.msk [vmem:[#allocation3 + $0x94] sm:$0xf] %vm788, %v1151
        %1187 = vst.msk [vmem:[#allocation3 + $0xa0] sm:$0xf] %vm788, %v1153
        %1188 = vst.msk [vmem:[#allocation3 + $0xac] sm:$0xf] %vm788, %v1155
        %1189 = vst.msk [vmem:[#allocation3 + $0xb8] sm:$0xf] %vm788, %v1157
        %v1190 = vld [vmem:[%s965 + $0x2] sm:$0xff]
        %v1191 = vld [vmem:[%s965 + $0x12] sm:$0xff]
        %v1192 = vld [vmem:[%s965 + $0x22] sm:$0xff]
        %v1193 = vld [vmem:[%s965 + $0x32] sm:$0xff]
        %v1194 = vld [vmem:[%s965 + $0x42] sm:$0xff]
        %v1195 = vld [vmem:[%s965 + $0x52] sm:$0xff]
        %v1196 = vld [vmem:[%s965 + $0x62] sm:$0xff]
        %v1197 = vld [vmem:[%s965 + $0x72] sm:$0xff]
        %v1198 = vld [vmem:[%s965 + $0xa2] sm:$0xff]
        %v1199 = vld [vmem:[%s965 + $0xb2] sm:$0xff]
        %v1200 = vld [vmem:[%s965 + $0xc2] sm:$0xff]
        %v1201 = vld [vmem:[%s965 + $0xd2] sm:$0xff]
        %v1202 = vld [vmem:[%s965 + $0xe2] sm:$0xff]
        %v1203 = vld [vmem:[%s965 + $0xf2] sm:$0xff]
        %v1204 = vld [vmem:[%s965 + $0x102] sm:$0xff]
        %v1205 = vld [vmem:[%s965 + $0x112] sm:$0xff]
        %v1206 = vpack.c.bf16 %v1190, %v1190
        %v1207 = vpack.c.bf16 %v1191, %v1191
        %v1208 = vpack.c.bf16 %v1192, %v1192
        %v1209 = vpack.c.bf16 %v1193, %v1193
        %v1210 = vpack.c.bf16 %v1194, %v1194
        %v1211 = vpack.c.bf16 %v1195, %v1195
        %v1212 = vpack.c.bf16 %v1196, %v1196
        %v1213 = vpack.c.bf16 %v1197, %v1197
        %v1214 = vpack.c.bf16 %v1198, %v1198
        %v1215 = vpack.c.bf16 %v1199, %v1199
        %v1216 = vpack.c.bf16 %v1200, %v1200
        %v1217 = vpack.c.bf16 %v1201, %v1201
        %v1218 = vpack.c.bf16 %v1202, %v1202
        %v1219 = vpack.c.bf16 %v1203, %v1203
        %v1220 = vpack.c.bf16 %v1204, %v1204
        %v1221 = vpack.c.bf16 %v1205, %v1205
        %1222 = vst.msk [vmem:[#allocation3 + $0x8] sm:$0xf] %vm448, %v1206
        %1223 = vst.msk [vmem:[#allocation3 + $0x14] sm:$0xf] %vm448, %v1207
        %1224 = vst.msk [vmem:[#allocation3 + $0x20] sm:$0xf] %vm448, %v1208
        %1225 = vst.msk [vmem:[#allocation3 + $0x2c] sm:$0xf] %vm448, %v1209
        %1226 = vst.msk [vmem:[#allocation3 + $0x38] sm:$0xf] %vm448, %v1210
        %1227 = vst.msk [vmem:[#allocation3 + $0x44] sm:$0xf] %vm448, %v1211
        %1228 = vst.msk [vmem:[#allocation3 + $0x50] sm:$0xf] %vm448, %v1212
        %1229 = vst.msk [vmem:[#allocation3 + $0x5c] sm:$0xf] %vm448, %v1213
        %1230 = vst.msk [vmem:[#allocation3 + $0x68] sm:$0xf] %vm448, %v1214
        %1231 = vst.msk [vmem:[#allocation3 + $0x74] sm:$0xf] %vm448, %v1215
        %1232 = vst.msk [vmem:[#allocation3 + $0x80] sm:$0xf] %vm448, %v1216
        %1233 = vst.msk [vmem:[#allocation3 + $0x8c] sm:$0xf] %vm448, %v1217
        %1234 = vst.msk [vmem:[#allocation3 + $0x98] sm:$0xf] %vm448, %v1218
        %1235 = vst.msk [vmem:[#allocation3 + $0xa4] sm:$0xf] %vm448, %v1219
        %1236 = vst.msk [vmem:[#allocation3 + $0xb0] sm:$0xf] %vm448, %v1220
        %1237 = vst.msk [vmem:[#allocation3 + $0xbc] sm:$0xf] %vm448, %v1221
        %v1238 = vld [vmem:[#allocation3] sm:$0xff]
        %v1239 = vld [vmem:[#allocation3 + $0x8] sm:$0xf]
        %v1240 = vld [vmem:[#allocation3 + $0xc] sm:$0xff]
        %v1241 = vld [vmem:[#allocation3 + $0x14] sm:$0xf]
        %v1242 = vld [vmem:[#allocation3 + $0x18] sm:$0xff]
        %v1243 = vld [vmem:[#allocation3 + $0x20] sm:$0xf]
        %v1244 = vld [vmem:[#allocation3 + $0x24] sm:$0xff]
        %v1245 = vld [vmem:[#allocation3 + $0x2c] sm:$0xf]
        %v1246 = vld [vmem:[#allocation3 + $0x30] sm:$0xff]
        %v1247 = vld [vmem:[#allocation3 + $0x38] sm:$0xf]
        %v1248 = vld [vmem:[#allocation3 + $0x3c] sm:$0xff]
        %v1249 = vld [vmem:[#allocation3 + $0x44] sm:$0xf]
        %v1250 = vld [vmem:[#allocation3 + $0x48] sm:$0xff]
        %v1251 = vld [vmem:[#allocation3 + $0x50] sm:$0xf]
        %v1252 = vld [vmem:[#allocation3 + $0x54] sm:$0xff]
        %v1253 = vld [vmem:[#allocation3 + $0x5c] sm:$0xf]
        %v1254 = vld [vmem:[#allocation3 + $0x60] sm:$0xff]
        %v1255 = vld [vmem:[#allocation3 + $0x68] sm:$0xf]
        %v1256 = vld [vmem:[#allocation3 + $0x6c] sm:$0xff]
        %v1257 = vld [vmem:[#allocation3 + $0x74] sm:$0xf]
        %v1258 = vld [vmem:[#allocation3 + $0x78] sm:$0xff]
        %v1259 = vld [vmem:[#allocation3 + $0x80] sm:$0xf]
        %v1260 = vld [vmem:[#allocation3 + $0x84] sm:$0xff]
        %v1261 = vld [vmem:[#allocation3 + $0x8c] sm:$0xf]
        %v1262 = vld [vmem:[#allocation3 + $0x90] sm:$0xff]
        %v1263 = vld [vmem:[#allocation3 + $0x98] sm:$0xf]
        %v1264 = vld [vmem:[#allocation3 + $0x9c] sm:$0xff]
        %v1265 = vld [vmem:[#allocation3 + $0xa4] sm:$0xf]
        %v1266 = vld [vmem:[#allocation3 + $0xa8] sm:$0xff]
        %v1267 = vld [vmem:[#allocation3 + $0xb0] sm:$0xf]
        %v1268 = vld [vmem:[#allocation3 + $0xb4] sm:$0xff]
        %v1269 = vld [vmem:[#allocation3 + $0xbc] sm:$0xf]
        %v1270 = vld [vmem:[%s313] sm:$0xf]
        %v1271 = vld [vmem:[%s313 + $0x4] sm:$0xf]
        %v1272 = vld [vmem:[%s313 + $0x8] sm:$0xf]
        %v1273 = vld [vmem:[%s313 + $0xc] sm:$0xf]
        %v1274 = vld [vmem:[%s313 + $0x10] sm:$0xf]
        %v1275 = vld [vmem:[%s313 + $0x14] sm:$0xf]
        %v1276 = vld [vmem:[%s313 + $0x18] sm:$0xf]
        %v1277 = vld [vmem:[%s313 + $0x1c] sm:$0xf]
        %v1278 = vld [vmem:[%s313 + $0x20] sm:$0xf]
        %v1279 = vld [vmem:[%s313 + $0x24] sm:$0xf]
        %v1280 = vld [vmem:[%s313 + $0x28] sm:$0xf]
        %v1281 = vld [vmem:[%s313 + $0x2c] sm:$0xf]
        %v1282 = vld [vmem:[%s313 + $0x30] sm:$0xf]
        %v1283 = vld [vmem:[%s313 + $0x34] sm:$0xf]
        %v1284 = vld [vmem:[%s313 + $0x38] sm:$0xf]
        %v1285 = vld [vmem:[%s313 + $0x3c] sm:$0xf]
        %v1286 = vld [vmem:[%s313 + $0x40] sm:$0xf]
        %v1287 = vld [vmem:[%s313 + $0x44] sm:$0xf]
        %v1288 = vld [vmem:[%s313 + $0x48] sm:$0xf]
        %v1289 = vld [vmem:[%s313 + $0x4c] sm:$0xf]
        %v1290 = vld [vmem:[%s313 + $0x50] sm:$0xf]
        %v1291 = vld [vmem:[%s313 + $0x54] sm:$0xf]
        %v1292 = vld [vmem:[%s313 + $0x58] sm:$0xf]
        %v1293 = vld [vmem:[%s313 + $0x5c] sm:$0xf]
        %v1294 = vld [vmem:[%s313 + $0x60] sm:$0xf]
        %v1295 = vld [vmem:[%s313 + $0x64] sm:$0xf]
        %v1296 = vld [vmem:[%s313 + $0x68] sm:$0xf]
        %v1297 = vld [vmem:[%s313 + $0x6c] sm:$0xf]
        %v1298 = vld [vmem:[%s313 + $0x70] sm:$0xf]
        %v1299 = vld [vmem:[%s313 + $0x74] sm:$0xf]
        %v1300 = vld [vmem:[%s313 + $0x78] sm:$0xf]
        %v1301 = vld [vmem:[%s313 + $0x7c] sm:$0xf]
        %v1302 = vld [vmem:[%s313 + $0x80] sm:$0xf]
        %v1303 = vld [vmem:[%s313 + $0x84] sm:$0xf]
        %v1304 = vld [vmem:[%s313 + $0x88] sm:$0xf]
        %v1305 = vld [vmem:[%s313 + $0x8c] sm:$0xf]
        %v1338 = vunpack.c.l.b16 %v1238
        %v1339 = vunpack.c.h.b16 %v1238
        %v1340 = vunpack.c.l.b16 %v1239
        %v1341 = vunpack.c.l.b16 %v1240
        %v1342 = vunpack.c.h.b16 %v1240
        %v1343 = vunpack.c.l.b16 %v1241
        %v1344 = vunpack.c.l.b16 %v1242
        %v1345 = vunpack.c.h.b16 %v1242
        %v1346 = vunpack.c.l.b16 %v1243
        %v1347 = vunpack.c.l.b16 %v1244
        %v1348 = vunpack.c.h.b16 %v1244
        %v1349 = vunpack.c.l.b16 %v1245
        %v1350 = vunpack.c.l.b16 %v1246
        %v1351 = vunpack.c.h.b16 %v1246
        %v1352 = vunpack.c.l.b16 %v1247
        %v1353 = vunpack.c.l.b16 %v1248
        %v1354 = vunpack.c.h.b16 %v1248
        %v1355 = vunpack.c.l.b16 %v1249
        %v1356 = vunpack.c.l.b16 %v1250
        %v1357 = vunpack.c.h.b16 %v1250
        %v1358 = vunpack.c.l.b16 %v1251
        %v1359 = vunpack.c.l.b16 %v1252
        %v1360 = vunpack.c.h.b16 %v1252
        %v1361 = vunpack.c.l.b16 %v1253
        %v1362 = vunpack.c.l.b16 %v1254
        %v1363 = vunpack.c.h.b16 %v1254
        %v1364 = vunpack.c.l.b16 %v1255
        %v1365 = vunpack.c.l.b16 %v1256
        %v1366 = vunpack.c.h.b16 %v1256
        %v1367 = vunpack.c.l.b16 %v1257
        %v1368 = vunpack.c.l.b16 %v1258
        %v1369 = vunpack.c.h.b16 %v1258
        %v1370 = vunpack.c.l.b16 %v1259
        %v1371 = vunpack.c.l.b16 %v1260
        %v1372 = vunpack.c.h.b16 %v1260
        %v1373 = vunpack.c.l.b16 %v1261
        %v1374 = vunpack.c.l.b16 %v1262
        %v1375 = vunpack.c.h.b16 %v1262
        %v1376 = vunpack.c.l.b16 %v1263
        %v1377 = vunpack.c.l.b16 %v1264
        %v1378 = vunpack.c.h.b16 %v1264
        %v1379 = vunpack.c.l.b16 %v1265
        %v1380 = vunpack.c.l.b16 %v1266
        %v1381 = vunpack.c.h.b16 %v1266
        %v1382 = vunpack.c.l.b16 %v1267
        %v1383 = vunpack.c.l.b16 %v1268
        %v1384 = vunpack.c.h.b16 %v1268
        %v1385 = vunpack.c.l.b16 %v1269
        %v1386 = vpack.c.b16 %v1341, %v1338
        %v1387 = vpack.c.b16 %v1342, %v1339
        %v1388 = vpack.c.b16 %v1343, %v1340
        %v1389 = vpack.c.b16 %v1347, %v1344
        %v1390 = vpack.c.b16 %v1348, %v1345
        %v1391 = vpack.c.b16 %v1349, %v1346
        %v1392 = vpack.c.b16 %v1353, %v1350
        %v1393 = vpack.c.b16 %v1354, %v1351
        %v1394 = vpack.c.b16 %v1355, %v1352
        %v1395 = vpack.c.b16 %v1359, %v1356
        %v1396 = vpack.c.b16 %v1360, %v1357
        %v1397 = vpack.c.b16 %v1361, %v1358
        %v1398 = vpack.c.b16 %v1365, %v1362
        %v1399 = vpack.c.b16 %v1366, %v1363
        %v1400 = vpack.c.b16 %v1367, %v1364
        %v1401 = vpack.c.b16 %v1371, %v1368
        %v1402 = vpack.c.b16 %v1372, %v1369
        %v1403 = vpack.c.b16 %v1373, %v1370
        %v1404 = vpack.c.b16 %v1377, %v1374
        %v1405 = vpack.c.b16 %v1378, %v1375
        %v1406 = vpack.c.b16 %v1379, %v1376
        %v1407 = vpack.c.b16 %v1383, %v1380
        %v1408 = vpack.c.b16 %v1384, %v1381
        %v1409 = vpack.c.b16 %v1385, %v1382
        %v1462 = vunpack.c.l.b16 %v1270
        %v1463 = vunpack.c.l.b16 %v1271
        %v1464 = vunpack.c.l.b16 %v1272
        %v1465 = vunpack.c.l.b16 %v1273
        %v1466 = vunpack.c.l.b16 %v1274
        %v1467 = vunpack.c.l.b16 %v1275
        %v1468 = vunpack.c.l.b16 %v1276
        %v1469 = vunpack.c.l.b16 %v1277
        %v1470 = vunpack.c.l.b16 %v1278
        %v1471 = vunpack.c.l.b16 %v1279
        %v1472 = vunpack.c.l.b16 %v1280
        %v1473 = vunpack.c.l.b16 %v1281
        %v1474 = vunpack.c.l.b16 %v1282
        %v1475 = vunpack.c.l.b16 %v1283
        %v1476 = vunpack.c.l.b16 %v1284
        %v1477 = vunpack.c.l.b16 %v1285
        %v1478 = vunpack.c.l.b16 %v1286
        %v1479 = vunpack.c.l.b16 %v1287
        %v1480 = vunpack.c.l.b16 %v1288
        %v1481 = vunpack.c.l.b16 %v1289
        %v1482 = vunpack.c.l.b16 %v1290
        %v1483 = vunpack.c.l.b16 %v1291
        %v1484 = vunpack.c.l.b16 %v1292
        %v1485 = vunpack.c.l.b16 %v1293
        %v1486 = vunpack.c.l.b16 %v1294
        %v1487 = vunpack.c.l.b16 %v1295
        %v1488 = vunpack.c.l.b16 %v1296
        %v1489 = vunpack.c.l.b16 %v1297
        %v1490 = vunpack.c.l.b16 %v1298
        %v1491 = vunpack.c.l.b16 %v1299
        %v1492 = vunpack.c.l.b16 %v1300
        %v1493 = vunpack.c.l.b16 %v1301
        %v1494 = vunpack.c.l.b16 %v1302
        %v1495 = vunpack.c.l.b16 %v1303
        %v1496 = vunpack.c.l.b16 %v1304
        %v1497 = vunpack.c.l.b16 %v1305
        %v1498 = vpack.c.b16 %v1463, %v1462
        %v1499 = vpack.c.b16 %v1465, %v1464
        %v1500 = vpack.c.b16 %v1467, %v1466
        %v1501 = vpack.c.b16 %v1469, %v1468
        %v1502 = vpack.c.b16 %v1471, %v1470
        %v1503 = vpack.c.b16 %v1473, %v1472
        %v1504 = vpack.c.b16 %v1475, %v1474
        %v1505 = vpack.c.b16 %v1477, %v1476
        %v1506 = vpack.c.b16 %v1479, %v1478
        %v1507 = vpack.c.b16 %v1481, %v1480
        %v1508 = vpack.c.b16 %v1483, %v1482
        %v1509 = vpack.c.b16 %v1485, %v1484
        %v1510 = vpack.c.b16 %v1487, %v1486
        %v1511 = vpack.c.b16 %v1489, %v1488
        %v1512 = vpack.c.b16 %v1491, %v1490
        %v1513 = vpack.c.b16 %v1493, %v1492
        %v1514 = vpack.c.b16 %v1495, %v1494
        %v1515 = vpack.c.b16 %v1497, %v1496
        %vm1534 = vcmask 261120
        %v1536 = vsel %vm1534, %v1388, 0
        %v1539 = vsel %vm1534, %v1391, 0
        %v1542 = vsel %vm1534, %v1394, 0
        %v1545 = vsel %vm1534, %v1397, 0
        %v1548 = vsel %vm1534, %v1400, 0
        %v1551 = vsel %vm1534, %v1403, 0
        %v1554 = vsel %vm1534, %v1406, 0
        %v1557 = vsel %vm1534, %v1409, 0
        %1559 = vmatpush.bf16.msra.mxu0 %v1505
        %1560 = vmatpush.bf16.msra.mxu0 %v1504
        %1561 = vmatpush.bf16.msra.mxu0 %v1503
        %1562 = vmatpush.bf16.msra.mxu0 %v1502
        %1563 = vmatpush.bf16.msra.mxu0 %v1501
        %1564 = vmatpush.bf16.msra.mxu0 %v1500
        %1565 = vmatpush.bf16.msra.mxu0 %v1499
        %1566 = vmatpush.bf16.msra.mxu0 %v1498
        %1567 = vmatmul.bf16.gmra.mxu0 %v1386
        %v1568 = vpop.f32.mrf.mxu0
        %v1569 = vadd.f32 0.0, %v1568
        %v1570 = vpop.f32.mrf.mxu0
        %v1571 = vadd.f32 0.0, %v1570
        %1572 = vmatmul.bf16.gmra.mxu0 %v1389
        %v1573 = vpop.f32.mrf.mxu0
        %v1574 = vadd.f32 0.0, %v1573
        %v1575 = vpop.f32.mrf.mxu0
        %v1576 = vadd.f32 0.0, %v1575
        %1577 = vmatmul.bf16.gmra.mxu0 %v1392
        %v1578 = vpop.f32.mrf.mxu0
        %v1579 = vadd.f32 0.0, %v1578
        %v1580 = vpop.f32.mrf.mxu0
        %v1581 = vadd.f32 0.0, %v1580
        %1582 = vmatmul.bf16.gmra.mxu0 %v1395
        %v1583 = vpop.f32.mrf.mxu0
        %v1584 = vadd.f32 0.0, %v1583
        %v1585 = vpop.f32.mrf.mxu0
        %v1586 = vadd.f32 0.0, %v1585
        %1587 = vmatmul.bf16.gmra.mxu0 %v1398
        %v1588 = vpop.f32.mrf.mxu0
        %v1589 = vadd.f32 0.0, %v1588
        %v1590 = vpop.f32.mrf.mxu0
        %v1591 = vadd.f32 0.0, %v1590
        %1592 = vmatmul.bf16.gmra.mxu0 %v1401
        %v1593 = vpop.f32.mrf.mxu0
        %v1594 = vadd.f32 0.0, %v1593
        %v1595 = vpop.f32.mrf.mxu0
        %v1596 = vadd.f32 0.0, %v1595
        %1597 = vmatmul.bf16.gmra.mxu0 %v1404
        %v1598 = vpop.f32.mrf.mxu0
        %v1599 = vadd.f32 0.0, %v1598
        %v1600 = vpop.f32.mrf.mxu0
        %v1601 = vadd.f32 0.0, %v1600
        %1602 = vmatmul.bf16.gmra.mxu0 %v1407
        %v1603 = vpop.f32.mrf.mxu0
        %v1604 = vadd.f32 0.0, %v1603
        %v1605 = vpop.f32.mrf.mxu0
        %v1606 = vadd.f32 0.0, %v1605
        %1607 = vdwg.mxu0
        %1608 = vmatpush.bf16.msra.mxu0 %v1513
        %1609 = vmatpush.bf16.msra.mxu0 %v1512
        %1610 = vmatpush.bf16.msra.mxu0 %v1511
        %1611 = vmatpush.bf16.msra.mxu0 %v1510
        %1612 = vmatpush.bf16.msra.mxu0 %v1509
        %1613 = vmatpush.bf16.msra.mxu0 %v1508
        %1614 = vmatpush.bf16.msra.mxu0 %v1507
        %1615 = vmatpush.bf16.msra.mxu0 %v1506
        %1616 = vmatmul.bf16.gmra.mxu0 %v1387
        %v1617 = vpop.f32.mrf.mxu0
        %v1618 = vadd.f32 %v1569, %v1617
        %v1619 = vpop.f32.mrf.mxu0
        %v1620 = vadd.f32 %v1571, %v1619
        %1621 = vmatmul.bf16.gmra.mxu0 %v1390
        %v1622 = vpop.f32.mrf.mxu0
        %v1623 = vadd.f32 %v1574, %v1622
        %v1624 = vpop.f32.mrf.mxu0
        %v1625 = vadd.f32 %v1576, %v1624
        %1626 = vmatmul.bf16.gmra.mxu0 %v1393
        %v1627 = vpop.f32.mrf.mxu0
        %v1628 = vadd.f32 %v1579, %v1627
        %v1629 = vpop.f32.mrf.mxu0
        %v1630 = vadd.f32 %v1581, %v1629
        %1631 = vmatmul.bf16.gmra.mxu0 %v1396
        %v1632 = vpop.f32.mrf.mxu0
        %v1633 = vadd.f32 %v1584, %v1632
        %v1634 = vpop.f32.mrf.mxu0
        %v1635 = vadd.f32 %v1586, %v1634
        %1636 = vmatmul.bf16.gmra.mxu0 %v1399
        %v1637 = vpop.f32.mrf.mxu0
        %v1638 = vadd.f32 %v1589, %v1637
        %v1639 = vpop.f32.mrf.mxu0
        %v1640 = vadd.f32 %v1591, %v1639
        %1641 = vmatmul.bf16.gmra.mxu0 %v1402
        %v1642 = vpop.f32.mrf.mxu0
        %v1643 = vadd.f32 %v1594, %v1642
        %v1644 = vpop.f32.mrf.mxu0
        %v1645 = vadd.f32 %v1596, %v1644
        %1646 = vmatmul.bf16.gmra.mxu0 %v1405
        %v1647 = vpop.f32.mrf.mxu0
        %v1648 = vadd.f32 %v1599, %v1647
        %v1649 = vpop.f32.mrf.mxu0
        %v1650 = vadd.f32 %v1601, %v1649
        %1651 = vmatmul.bf16.gmra.mxu0 %v1408
        %v1652 = vpop.f32.mrf.mxu0
        %v1653 = vadd.f32 %v1604, %v1652
        %v1654 = vpop.f32.mrf.mxu0
        %v1655 = vadd.f32 %v1606, %v1654
        %1656 = vdwg.mxu0
        %1657 = vmatpush.bf16.msra.mxu0 0
        %1658 = vmatpush.bf16.msra.mxu0 0
        %1659 = vmatpush.bf16.msra.mxu0 0
        %1660 = vmatpush.bf16.msra.mxu0 0
        %1661 = vmatpush.bf16.msra.mxu0 0
        %1662 = vmatpush.bf16.msra.mxu0 0
        %1663 = vmatpush.bf16.msra.mxu0 %v1515
        %1664 = vmatpush.bf16.msra.mxu0 %v1514
        %1665 = vmatmul.bf16.gmra.mxu0 %v1536
        %v1666 = vpop.f32.mrf.mxu0
        %v1667 = vadd.f32 %v1618, %v1666
        %v1668 = vpop.f32.mrf.mxu0
        %v1669 = vadd.f32 %v1620, %v1668
        %1670 = vmatmul.bf16.gmra.mxu0 %v1539
        %v1671 = vpop.f32.mrf.mxu0
        %v1672 = vadd.f32 %v1623, %v1671
        %v1673 = vpop.f32.mrf.mxu0
        %v1674 = vadd.f32 %v1625, %v1673
        %1675 = vmatmul.bf16.gmra.mxu0 %v1542
        %v1676 = vpop.f32.mrf.mxu0
        %v1677 = vadd.f32 %v1628, %v1676
        %v1678 = vpop.f32.mrf.mxu0
        %v1679 = vadd.f32 %v1630, %v1678
        %1680 = vmatmul.bf16.gmra.mxu0 %v1545
        %v1681 = vpop.f32.mrf.mxu0
        %v1682 = vadd.f32 %v1633, %v1681
        %v1683 = vpop.f32.mrf.mxu0
        %v1684 = vadd.f32 %v1635, %v1683
        %1685 = vmatmul.bf16.gmra.mxu0 %v1548
        %v1686 = vpop.f32.mrf.mxu0
        %v1687 = vadd.f32 %v1638, %v1686
        %v1688 = vpop.f32.mrf.mxu0
        %v1689 = vadd.f32 %v1640, %v1688
        %1690 = vmatmul.bf16.gmra.mxu0 %v1551
        %v1691 = vpop.f32.mrf.mxu0
        %v1692 = vadd.f32 %v1643, %v1691
        %v1693 = vpop.f32.mrf.mxu0
        %v1694 = vadd.f32 %v1645, %v1693
        %1695 = vmatmul.bf16.gmra.mxu0 %v1554
        %v1696 = vpop.f32.mrf.mxu0
        %v1697 = vadd.f32 %v1648, %v1696
        %v1698 = vpop.f32.mrf.mxu0
        %v1699 = vadd.f32 %v1650, %v1698
        %1700 = vmatmul.bf16.gmra.mxu0 %v1557
        %v1701 = vpop.f32.mrf.mxu0
        %v1702 = vadd.f32 %v1653, %v1701
        %v1703 = vpop.f32.mrf.mxu0
        %v1704 = vadd.f32 %v1655, %v1703
        %1705 = vdwg.mxu0
        %v1706 = vld [vmem:[%s316] sm:$0x1]
        %v1708 = vperm.slane %v1706, 0
        %v1710 = vmul.f32 %v1667, %v1708
        %v1711 = vmul.f32 %v1669, %v1708
        %v1712 = vmul.f32 %v1672, %v1708
        %v1713 = vmul.f32 %v1674, %v1708
        %v1714 = vmul.f32 %v1677, %v1708
        %v1715 = vmul.f32 %v1679, %v1708
        %v1716 = vmul.f32 %v1682, %v1708
        %v1717 = vmul.f32 %v1684, %v1708
        %v1718 = vmul.f32 %v1687, %v1708
        %v1719 = vmul.f32 %v1689, %v1708
        %v1720 = vmul.f32 %v1692, %v1708
        %v1721 = vmul.f32 %v1694, %v1708
        %v1722 = vmul.f32 %v1697, %v1708
        %v1723 = vmul.f32 %v1699, %v1708
        %v1724 = vmul.f32 %v1702, %v1708
        %v1725 = vmul.f32 %v1704, %v1708
        %v1726 = vld [vmem:[%s319] sm:$0x1]
        %v1728 = vperm.slane %v1726, 0
        %v1730 = vadd.f32 %v1710, %v1728
        %v1731 = vadd.f32 %v1711, %v1728
        %v1732 = vadd.f32 %v1712, %v1728
        %v1733 = vadd.f32 %v1713, %v1728
        %v1734 = vadd.f32 %v1714, %v1728
        %v1735 = vadd.f32 %v1715, %v1728
        %v1736 = vadd.f32 %v1716, %v1728
        %v1737 = vadd.f32 %v1717, %v1728
        %v1738 = vadd.f32 %v1718, %v1728
        %v1739 = vadd.f32 %v1719, %v1728
        %v1740 = vadd.f32 %v1720, %v1728
        %v1741 = vadd.f32 %v1721, %v1728
        %v1742 = vadd.f32 %v1722, %v1728
        %v1743 = vadd.f32 %v1723, %v1728
        %v1744 = vadd.f32 %v1724, %v1728
        %v1745 = vadd.f32 %v1725, %v1728
        %p1746 = scmp.ge.s32.totalorder %s20, 2
        %p1747 = scmp.lt.s32.totalorder %s20, 0
        %s1748 = ssub.s32 0, %s20
        %s1749 = scalar_select %p1747, %s1748, %s20
        %s1750 = sand.u32 %s1749, 1
        %s1751 = ssub.s32 0, %s1750
        %s1752 = scalar_select %p1747, %s1751, %s1750
        %p1753 = scmp.ne.s32.totalorder %s1752, 0
        %p1754 = scmp.lt.s32.totalorder %s1752, 0
        %p1755 = pnand %p1754, %p1753
        %p1756 = pneg %p1755
        %s1757 = sadd.s32 %s1752, 2
        %s1758 = scalar_select %p1756, %s1757, %s1752
        %p1759 = scmp.eq.s32.totalorder %s1758, 0
        %p1760 = pnand %p1746, %p1759
        %p1761 = pneg %p1760
        %s1762 = scalar_select %p1761, 1, 0
        %s1763 = scvt.s32.f32 %s1762
        %v1764 = vld [vmem:[#allocation4] sm:$0xff]
        %v1765 = vld [vmem:[#allocation4 + $0x8] sm:$0xff]
        %v1766 = vld [vmem:[#allocation4 + $0x10] sm:$0xff]
        %v1767 = vld [vmem:[#allocation4 + $0x18] sm:$0xff]
        %v1768 = vld [vmem:[#allocation4 + $0x20] sm:$0xff]
        %v1769 = vld [vmem:[#allocation4 + $0x28] sm:$0xff]
        %v1770 = vld [vmem:[#allocation4 + $0x30] sm:$0xff]
        %v1771 = vld [vmem:[#allocation4 + $0x38] sm:$0xff]
        %v1772 = vld [vmem:[#allocation4 + $0x40] sm:$0xff]
        %v1773 = vld [vmem:[#allocation4 + $0x48] sm:$0xff]
        %v1774 = vld [vmem:[#allocation4 + $0x50] sm:$0xff]
        %v1775 = vld [vmem:[#allocation4 + $0x58] sm:$0xff]
        %v1776 = vld [vmem:[#allocation4 + $0x60] sm:$0xff]
        %v1777 = vld [vmem:[#allocation4 + $0x68] sm:$0xff]
        %v1778 = vld [vmem:[#allocation4 + $0x70] sm:$0xff]
        %v1779 = vld [vmem:[#allocation4 + $0x78] sm:$0xff]
        %v1780 = vstv %s1763
        %v1781 = vmul.f32 %v1780, %v1764
        %v1782 = vmul.f32 %v1780, %v1765
        %v1783 = vmul.f32 %v1780, %v1766
        %v1784 = vmul.f32 %v1780, %v1767
        %v1785 = vmul.f32 %v1780, %v1768
        %v1786 = vmul.f32 %v1780, %v1769
        %v1787 = vmul.f32 %v1780, %v1770
        %v1788 = vmul.f32 %v1780, %v1771
        %v1789 = vmul.f32 %v1780, %v1772
        %v1790 = vmul.f32 %v1780, %v1773
        %v1791 = vmul.f32 %v1780, %v1774
        %v1792 = vmul.f32 %v1780, %v1775
        %v1793 = vmul.f32 %v1780, %v1776
        %v1794 = vmul.f32 %v1780, %v1777
        %v1795 = vmul.f32 %v1780, %v1778
        %v1796 = vmul.f32 %v1780, %v1779
        %v1797 = vadd.f32 %v1730, %v1781
        %v1798 = vadd.f32 %v1731, %v1782
        %v1799 = vadd.f32 %v1732, %v1783
        %v1800 = vadd.f32 %v1733, %v1784
        %v1801 = vadd.f32 %v1734, %v1785
        %v1802 = vadd.f32 %v1735, %v1786
        %v1803 = vadd.f32 %v1736, %v1787
        %v1804 = vadd.f32 %v1737, %v1788
        %v1805 = vadd.f32 %v1738, %v1789
        %v1806 = vadd.f32 %v1739, %v1790
        %v1807 = vadd.f32 %v1740, %v1791
        %v1808 = vadd.f32 %v1741, %v1792
        %v1809 = vadd.f32 %v1742, %v1793
        %v1810 = vadd.f32 %v1743, %v1794
        %v1811 = vadd.f32 %v1744, %v1795
        %v1812 = vadd.f32 %v1745, %v1796
        %v1813 = vmax.f32 %v1797, 0.0
        %v1814 = vmax.f32 %v1798, 0.0
        %v1815 = vmax.f32 %v1799, 0.0
        %v1816 = vmax.f32 %v1800, 0.0
        %v1817 = vmax.f32 %v1801, 0.0
        %v1818 = vmax.f32 %v1802, 0.0
        %v1819 = vmax.f32 %v1803, 0.0
        %v1820 = vmax.f32 %v1804, 0.0
        %v1821 = vmax.f32 %v1805, 0.0
        %v1822 = vmax.f32 %v1806, 0.0
        %v1823 = vmax.f32 %v1807, 0.0
        %v1824 = vmax.f32 %v1808, 0.0
        %v1825 = vmax.f32 %v1809, 0.0
        %v1826 = vmax.f32 %v1810, 0.0
        %v1827 = vmax.f32 %v1811, 0.0
        %v1828 = vmax.f32 %v1812, 0.0
        %p1829 = scmp.lt.s32.totalorder %s20, 20
        %p1830 = pnand %p1759, %p1829
        %p1831 = pneg %p1830
        // Predicated region
        $region57: #{policy_net_forward.1} parent=51 // pred_check
          _
        $region58: #{policy_net_forward.1} parent=51 // pred_check_branch
          %1833 = sbr.rel (%p1830) target = $region60
        $region59: #{policy_net_forward.1} parent=51 // pred_region
          %1834 = vst.msk [vmem:[#allocation4] sm:$0xff] %vm1534, %v1813
          %1835 = vst.msk [vmem:[#allocation4 + $0x8] sm:$0xff] %vm1534, %v1814
          %1836 = vst.msk [vmem:[#allocation4 + $0x10] sm:$0xff] %vm1534, %v1815
          %1837 = vst.msk [vmem:[#allocation4 + $0x18] sm:$0xff] %vm1534, %v1816
          %1838 = vst.msk [vmem:[#allocation4 + $0x20] sm:$0xff] %vm1534, %v1817
          %1839 = vst.msk [vmem:[#allocation4 + $0x28] sm:$0xff] %vm1534, %v1818
          %1840 = vst.msk [vmem:[#allocation4 + $0x30] sm:$0xff] %vm1534, %v1819
          %1841 = vst.msk [vmem:[#allocation4 + $0x38] sm:$0xff] %vm1534, %v1820
          %1842 = vst.msk [vmem:[#allocation4 + $0x40] sm:$0xff] %vm1534, %v1821
          %1843 = vst.msk [vmem:[#allocation4 + $0x48] sm:$0xff] %vm1534, %v1822
          %1844 = vst.msk [vmem:[#allocation4 + $0x50] sm:$0xff] %vm1534, %v1823
          %1845 = vst.msk [vmem:[#allocation4 + $0x58] sm:$0xff] %vm1534, %v1824
          %1846 = vst.msk [vmem:[#allocation4 + $0x60] sm:$0xff] %vm1534, %v1825
          %1847 = vst.msk [vmem:[#allocation4 + $0x68] sm:$0xff] %vm1534, %v1826
          %1848 = vst.msk [vmem:[#allocation4 + $0x70] sm:$0xff] %vm1534, %v1827
          %1849 = vst.msk [vmem:[#allocation4 + $0x78] sm:$0xff] %vm1534, %v1828
        $region60: #{policy_net_forward.1} parent=51 // pred_fallthru
          _
        %1850 = vst.msk [vmem:[%s691 + $0x1] sm:$0xff] %vm1534, %v1813
        %1851 = vst.msk [vmem:[%s691 + $0x11] sm:$0xff] %vm1534, %v1814
        %1852 = vst.msk [vmem:[%s691 + $0x21] sm:$0xff] %vm1534, %v1815
        %1853 = vst.msk [vmem:[%s691 + $0x31] sm:$0xff] %vm1534, %v1816
        %1854 = vst.msk [vmem:[%s691 + $0x41] sm:$0xff] %vm1534, %v1817
        %1855 = vst.msk [vmem:[%s691 + $0x51] sm:$0xff] %vm1534, %v1818
        %1856 = vst.msk [vmem:[%s691 + $0x61] sm:$0xff] %vm1534, %v1819
        %1857 = vst.msk [vmem:[%s691 + $0x71] sm:$0xff] %vm1534, %v1820
        %1858 = vst.msk [vmem:[%s691 + $0xa1] sm:$0xff] %vm1534, %v1821
        %1859 = vst.msk [vmem:[%s691 + $0xb1] sm:$0xff] %vm1534, %v1822
        %1860 = vst.msk [vmem:[%s691 + $0xc1] sm:$0xff] %vm1534, %v1823
        %1861 = vst.msk [vmem:[%s691 + $0xd1] sm:$0xff] %vm1534, %v1824
        %1862 = vst.msk [vmem:[%s691 + $0xe1] sm:$0xff] %vm1534, %v1825
        %1863 = vst.msk [vmem:[%s691 + $0xf1] sm:$0xff] %vm1534, %v1826
        %1864 = vst.msk [vmem:[%s691 + $0x101] sm:$0xff] %vm1534, %v1827
        %1865 = vst.msk [vmem:[%s691 + $0x111] sm:$0xff] %vm1534, %v1828
        %p1866 = scmp.eq.s32.totalorder %s20, 20
        // Predicated region
        $region61: #{policy_net_forward.1} parent=51 // pred_check
          %p1867 = pneg %p1866
        $region62: #{policy_net_forward.1} parent=51 // pred_check_branch
          %1869 = sbr.rel (%p1867) target = $region64
        $region63: #{policy_net_forward.1} parent=51 // pred_region
          %v1870 = vld [vmem:[%s4] sm:$0xff]
          %v1871 = vld [vmem:[%s4 + $0x8] sm:$0xff]
          %v1872 = vld [vmem:[%s4 + $0x10] sm:$0xff]
          %v1873 = vld [vmem:[%s4 + $0x18] sm:$0xff]
          %v1874 = vld [vmem:[%s5] sm:$0x1]
          %v1876 = vperm.slane %v1874, 0
          %v1879 = vsel %vm1534, %v1813, 0
          %v1882 = vsel %vm1534, %v1814, 0
          %v1885 = vsel %vm1534, %v1815, 0
          %v1888 = vsel %vm1534, %v1816, 0
          %v1891 = vsel %vm1534, %v1817, 0
          %v1894 = vsel %vm1534, %v1818, 0
          %v1897 = vsel %vm1534, %v1819, 0
          %v1900 = vsel %vm1534, %v1820, 0
          %v1903 = vsel %vm1534, %v1821, 0
          %v1906 = vsel %vm1534, %v1822, 0
          %v1909 = vsel %vm1534, %v1823, 0
          %v1912 = vsel %vm1534, %v1824, 0
          %v1915 = vsel %vm1534, %v1825, 0
          %v1918 = vsel %vm1534, %v1826, 0
          %v1921 = vsel %vm1534, %v1827, 0
          %v1924 = vsel %vm1534, %v1828, 0
          %1926 = vmatpush.msra.mxu0 0.0
          %1927 = vmatpush.msra.mxu0 0.0
          %1928 = vmatpush.msra.mxu0 0.0
          %1929 = vmatpush.msra.mxu0 0.0
          %1930 = vmatpush.msra.mxu0 0.0
          %1931 = vmatpush.msra.mxu0 0.0
          %1932 = vmatpush.msra.mxu0 0.0
          %1933 = vmatpush.msra.mxu0 0.0
          %1934 = vmatpush.msra.mxu0 0.0
          %1935 = vmatpush.msra.mxu0 0.0
          %1936 = vmatpush.msra.mxu0 0.0
          %1937 = vmatpush.msra.mxu0 0.0
          %1938 = vmatpush.msra.mxu0 %v1873
          %1939 = vmatpush.msra.mxu0 %v1872
          %1940 = vmatpush.msra.mxu0 %v1871
          %1941 = vmatpush.msra.mxu0 %v1870
          %1942 = vmatmul.f32.gmra.mxu0 %v1879
          %v1943 = vpop.f32.mrf.mxu0
          %v1944 = vadd.f32 %v1876, %v1943
          %1945 = vmatmul.f32.gmra.mxu0 %v1882
          %v1946 = vpop.f32.mrf.mxu0
          %v1947 = vadd.f32 %v1876, %v1946
          %1948 = vmatmul.f32.gmra.mxu0 %v1885
          %v1949 = vpop.f32.mrf.mxu0
          %v1950 = vadd.f32 %v1876, %v1949
          %1951 = vmatmul.f32.gmra.mxu0 %v1888
          %v1952 = vpop.f32.mrf.mxu0
          %v1953 = vadd.f32 %v1876, %v1952
          %1954 = vmatmul.f32.gmra.mxu0 %v1891
          %v1955 = vpop.f32.mrf.mxu0
          %v1956 = vadd.f32 %v1876, %v1955
          %1957 = vmatmul.f32.gmra.mxu0 %v1894
          %v1958 = vpop.f32.mrf.mxu0
          %v1959 = vadd.f32 %v1876, %v1958
          %1960 = vmatmul.f32.gmra.mxu0 %v1897
          %v1961 = vpop.f32.mrf.mxu0
          %v1962 = vadd.f32 %v1876, %v1961
          %1963 = vmatmul.f32.gmra.mxu0 %v1900
          %v1964 = vpop.f32.mrf.mxu0
          %v1965 = vadd.f32 %v1876, %v1964
          %1966 = vmatmul.f32.gmra.mxu0 %v1903
          %v1967 = vpop.f32.mrf.mxu0
          %v1968 = vadd.f32 %v1876, %v1967
          %1969 = vmatmul.f32.gmra.mxu0 %v1906
          %v1970 = vpop.f32.mrf.mxu0
          %v1971 = vadd.f32 %v1876, %v1970
          %1972 = vmatmul.f32.gmra.mxu0 %v1909
          %v1973 = vpop.f32.mrf.mxu0
          %v1974 = vadd.f32 %v1876, %v1973
          %1975 = vmatmul.f32.gmra.mxu0 %v1912
          %v1976 = vpop.f32.mrf.mxu0
          %v1977 = vadd.f32 %v1876, %v1976
          %1978 = vmatmul.f32.gmra.mxu0 %v1915
          %v1979 = vpop.f32.mrf.mxu0
          %v1980 = vadd.f32 %v1876, %v1979
          %1981 = vmatmul.f32.gmra.mxu0 %v1918
          %v1982 = vpop.f32.mrf.mxu0
          %v1983 = vadd.f32 %v1876, %v1982
          %1984 = vmatmul.f32.gmra.mxu0 %v1921
          %v1985 = vpop.f32.mrf.mxu0
          %v1986 = vadd.f32 %v1876, %v1985
          %1987 = vmatmul.f32.gmra.mxu0 %v1924
          %v1988 = vpop.f32.mrf.mxu0
          %v1989 = vadd.f32 %v1876, %v1988
          %1990 = vdwg.mxu0
          %v1991 = vmax.f32 %v1944, 0.0
          %v1992 = vmax.f32 %v1947, 0.0
          %v1993 = vmax.f32 %v1950, 0.0
          %v1994 = vmax.f32 %v1953, 0.0
          %v1995 = vmax.f32 %v1956, 0.0
          %v1996 = vmax.f32 %v1959, 0.0
          %v1997 = vmax.f32 %v1962, 0.0
          %v1998 = vmax.f32 %v1965, 0.0
          %v1999 = vmax.f32 %v1968, 0.0
          %v2000 = vmax.f32 %v1971, 0.0
          %v2001 = vmax.f32 %v1974, 0.0
          %v2002 = vmax.f32 %v1977, 0.0
          %v2003 = vmax.f32 %v1980, 0.0
          %v2004 = vmax.f32 %v1983, 0.0
          %v2005 = vmax.f32 %v1986, 0.0
          %v2006 = vmax.f32 %v1989, 0.0
          %v2007 = vld [vmem:[%s6] sm:$0xff]
          %v2008 = vld [vmem:[%s6 + $0x8] sm:$0xff]
          %v2009 = vld [vmem:[%s6 + $0x10] sm:$0xff]
          %v2010 = vld [vmem:[%s6 + $0x18] sm:$0xff]
          %v2011 = vld [vmem:[%s6 + $0x20] sm:$0xff]
          %v2012 = vld [vmem:[%s6 + $0x28] sm:$0xff]
          %v2013 = vld [vmem:[%s6 + $0x30] sm:$0xff]
          %v2014 = vld [vmem:[%s6 + $0x38] sm:$0xff]
          %2016 = vset.pattern.permute.xlu0 0
          %2017 = vperm.xlu0 %2016, %v1991
          %v2018 = vpop.permute.xlu0 %2017
          %2021 = vset.pattern.permute.xlu0 0
          %2022 = vperm.xlu0 %2021, %v1992
          %v2023 = vpop.permute.xlu0 %2022
          %2026 = vset.pattern.permute.xlu0 0
          %2027 = vperm.xlu0 %2026, %v1993
          %v2028 = vpop.permute.xlu0 %2027
          %2031 = vset.pattern.permute.xlu0 0
          %2032 = vperm.xlu0 %2031, %v1994
          %v2033 = vpop.permute.xlu0 %2032
          %2036 = vset.pattern.permute.xlu0 0
          %2037 = vperm.xlu0 %2036, %v1995
          %v2038 = vpop.permute.xlu0 %2037
          %2041 = vset.pattern.permute.xlu0 0
          %2042 = vperm.xlu0 %2041, %v1996
          %v2043 = vpop.permute.xlu0 %2042
          %2046 = vset.pattern.permute.xlu0 0
          %2047 = vperm.xlu0 %2046, %v1997
          %v2048 = vpop.permute.xlu0 %2047
          %2051 = vset.pattern.permute.xlu0 0
          %2052 = vperm.xlu0 %2051, %v1998
          %v2053 = vpop.permute.xlu0 %2052
          %v2055 = vmul.f32 %v2018, %v2007
          %v2056 = vmul.f32 %v2023, %v2008
          %v2057 = vmul.f32 %v2028, %v2009
          %v2058 = vmul.f32 %v2033, %v2010
          %v2059 = vmul.f32 %v2038, %v2011
          %v2060 = vmul.f32 %v2043, %v2012
          %v2061 = vmul.f32 %v2048, %v2013
          %v2062 = vmul.f32 %v2053, %v2014
          %s2063 = scalar_lea.vmem %s6, 64
          %v2064 = vld [vmem:[%s2063] sm:$0xff]
          %v2065 = vld [vmem:[%s2063 + $0x8] sm:$0xff]
          %v2066 = vld [vmem:[%s2063 + $0x10] sm:$0xff]
          %v2067 = vld [vmem:[%s2063 + $0x18] sm:$0xff]
          %v2068 = vld [vmem:[%s2063 + $0x20] sm:$0xff]
          %v2069 = vld [vmem:[%s2063 + $0x28] sm:$0xff]
          %v2070 = vld [vmem:[%s2063 + $0x30] sm:$0xff]
          %v2071 = vld [vmem:[%s2063 + $0x38] sm:$0xff]
          %2072 = vset.pattern.permute.xlu0 1
          %2073 = vperm.xlu0 %2072, %v1991
          %v2074 = vpop.permute.xlu0 %2073
          %2076 = vset.pattern.permute.xlu0 1
          %2077 = vperm.xlu0 %2076, %v1992
          %v2078 = vpop.permute.xlu0 %2077
          %2080 = vset.pattern.permute.xlu0 1
          %2081 = vperm.xlu0 %2080, %v1993
          %v2082 = vpop.permute.xlu0 %2081
          %2084 = vset.pattern.permute.xlu0 1
          %2085 = vperm.xlu0 %2084, %v1994
          %v2086 = vpop.permute.xlu0 %2085
          %2088 = vset.pattern.permute.xlu0 1
          %2089 = vperm.xlu0 %2088, %v1995
          %v2090 = vpop.permute.xlu0 %2089
          %2092 = vset.pattern.permute.xlu0 1
          %2093 = vperm.xlu0 %2092, %v1996
          %v2094 = vpop.permute.xlu0 %2093
          %2096 = vset.pattern.permute.xlu0 1
          %2097 = vperm.xlu0 %2096, %v1997
          %v2098 = vpop.permute.xlu0 %2097
          %2100 = vset.pattern.permute.xlu0 1
          %2101 = vperm.xlu0 %2100, %v1998
          %v2102 = vpop.permute.xlu0 %2101
          %v2104 = vmul.f32 %v2074, %v2064
          %v2105 = vmul.f32 %v2078, %v2065
          %v2106 = vmul.f32 %v2082, %v2066
          %v2107 = vmul.f32 %v2086, %v2067
          %v2108 = vmul.f32 %v2090, %v2068
          %v2109 = vmul.f32 %v2094, %v2069
          %v2110 = vmul.f32 %v2098, %v2070
          %v2111 = vmul.f32 %v2102, %v2071
          %v2112 = vadd.f32 %v2055, %v2104
          %v2113 = vadd.f32 %v2056, %v2105
          %v2114 = vadd.f32 %v2057, %v2106
          %v2115 = vadd.f32 %v2058, %v2107
          %v2116 = vadd.f32 %v2059, %v2108
          %v2117 = vadd.f32 %v2060, %v2109
          %v2118 = vadd.f32 %v2061, %v2110
          %v2119 = vadd.f32 %v2062, %v2111
          %vm2120 = vcmask 523264
          %v2121 = vsel %vm2120, %v2112, 0.0
          %v2122 = vsel %vm2120, %v2113, 0.0
          %v2123 = vadd.f32 %v2121, %v2122
          %v2124 = vsel %vm2120, %v2114, 0.0
          %v2125 = vadd.f32 %v2123, %v2124
          %v2126 = vsel %vm2120, %v2115, 0.0
          %v2127 = vadd.f32 %v2125, %v2126
          %v2128 = vsel %vm2120, %v2116, 0.0
          %v2129 = vadd.f32 %v2127, %v2128
          %v2130 = vsel %vm2120, %v2117, 0.0
          %v2131 = vadd.f32 %v2129, %v2130
          %v2132 = vsel %vm2120, %v2118, 0.0
          %v2133 = vadd.f32 %v2131, %v2132
          %v2134 = vsel %vm2120, %v2119, 0.0
          %v2135 = vadd.f32 %v2133, %v2134
          %v2136 = vrot.slane %v2135, 4
          %v2137 = vadd.f32 %v2135, %v2136
          %v2138 = vrot.slane %v2137, 2
          %v2139 = vadd.f32 %v2137, %v2138
          %v2140 = vrot.slane %v2139, 1
          %v2141 = vadd.f32 %v2139, %v2140
          %2143 = vset.pattern.permute.xlu0 0
          %2144 = vperm.xlu0 %2143, %v1999
          %v2145 = vpop.permute.xlu0 %2144
          %2148 = vset.pattern.permute.xlu0 0
          %2149 = vperm.xlu0 %2148, %v2000
          %v2150 = vpop.permute.xlu0 %2149
          %2153 = vset.pattern.permute.xlu0 0
          %2154 = vperm.xlu0 %2153, %v2001
          %v2155 = vpop.permute.xlu0 %2154
          %2158 = vset.pattern.permute.xlu0 0
          %2159 = vperm.xlu0 %2158, %v2002
          %v2160 = vpop.permute.xlu0 %2159
          %2163 = vset.pattern.permute.xlu0 0
          %2164 = vperm.xlu0 %2163, %v2003
          %v2165 = vpop.permute.xlu0 %2164
          %2168 = vset.pattern.permute.xlu0 0
          %2169 = vperm.xlu0 %2168, %v2004
          %v2170 = vpop.permute.xlu0 %2169
          %2173 = vset.pattern.permute.xlu0 0
          %2174 = vperm.xlu0 %2173, %v2005
          %v2175 = vpop.permute.xlu0 %2174
          %2178 = vset.pattern.permute.xlu0 0
          %2179 = vperm.xlu0 %2178, %v2006
          %v2180 = vpop.permute.xlu0 %2179
          %v2182 = vmul.f32 %v2145, %v2007
          %v2183 = vmul.f32 %v2150, %v2008
          %v2184 = vmul.f32 %v2155, %v2009
          %v2185 = vmul.f32 %v2160, %v2010
          %v2186 = vmul.f32 %v2165, %v2011
          %v2187 = vmul.f32 %v2170, %v2012
          %v2188 = vmul.f32 %v2175, %v2013
          %v2189 = vmul.f32 %v2180, %v2014
          %2190 = vset.pattern.permute.xlu0 1
          %2191 = vperm.xlu0 %2190, %v1999
          %v2192 = vpop.permute.xlu0 %2191
          %2194 = vset.pattern.permute.xlu0 1
          %2195 = vperm.xlu0 %2194, %v2000
          %v2196 = vpop.permute.xlu0 %2195
          %2198 = vset.pattern.permute.xlu0 1
          %2199 = vperm.xlu0 %2198, %v2001
          %v2200 = vpop.permute.xlu0 %2199
          %2202 = vset.pattern.permute.xlu0 1
          %2203 = vperm.xlu0 %2202, %v2002
          %v2204 = vpop.permute.xlu0 %2203
          %2206 = vset.pattern.permute.xlu0 1
          %2207 = vperm.xlu0 %2206, %v2003
          %v2208 = vpop.permute.xlu0 %2207
          %2210 = vset.pattern.permute.xlu0 1
          %2211 = vperm.xlu0 %2210, %v2004
          %v2212 = vpop.permute.xlu0 %2211
          %2214 = vset.pattern.permute.xlu0 1
          %2215 = vperm.xlu0 %2214, %v2005
          %v2216 = vpop.permute.xlu0 %2215
          %2218 = vset.pattern.permute.xlu0 1
          %2219 = vperm.xlu0 %2218, %v2006
          %v2220 = vpop.permute.xlu0 %2219
          %v2222 = vmul.f32 %v2192, %v2064
          %v2223 = vmul.f32 %v2196, %v2065
          %v2224 = vmul.f32 %v2200, %v2066
          %v2225 = vmul.f32 %v2204, %v2067
          %v2226 = vmul.f32 %v2208, %v2068
          %v2227 = vmul.f32 %v2212, %v2069
          %v2228 = vmul.f32 %v2216, %v2070
          %v2229 = vmul.f32 %v2220, %v2071
          %v2230 = vadd.f32 %v2182, %v2222
          %v2231 = vadd.f32 %v2183, %v2223
          %v2232 = vadd.f32 %v2184, %v2224
          %v2233 = vadd.f32 %v2185, %v2225
          %v2234 = vadd.f32 %v2186, %v2226
          %v2235 = vadd.f32 %v2187, %v2227
          %v2236 = vadd.f32 %v2188, %v2228
          %v2237 = vadd.f32 %v2189, %v2229
          %v2238 = vsel %vm2120, %v2230, 0.0
          %v2239 = vsel %vm2120, %v2231, 0.0
          %v2240 = vadd.f32 %v2238, %v2239
          %v2241 = vsel %vm2120, %v2232, 0.0
          %v2242 = vadd.f32 %v2240, %v2241
          %v2243 = vsel %vm2120, %v2233, 0.0
          %v2244 = vadd.f32 %v2242, %v2243
          %v2245 = vsel %vm2120, %v2234, 0.0
          %v2246 = vadd.f32 %v2244, %v2245
          %v2247 = vsel %vm2120, %v2235, 0.0
          %v2248 = vadd.f32 %v2246, %v2247
          %v2249 = vsel %vm2120, %v2236, 0.0
          %v2250 = vadd.f32 %v2248, %v2249
          %v2251 = vsel %vm2120, %v2237, 0.0
          %v2252 = vadd.f32 %v2250, %v2251
          %v2253 = vrot.slane %v2252, 4
          %v2254 = vadd.f32 %v2252, %v2253
          %v2255 = vrot.slane %v2254, 2
          %v2256 = vadd.f32 %v2254, %v2255
          %v2257 = vrot.slane %v2256, 1
          %v2258 = vadd.f32 %v2256, %v2257
          %vm2259 = vcmask 1040384
          %v2260 = vsel %vm2259, %v2141, %v2258
          %v2261 = vld [vmem:[%s7] sm:$0x1]
          %v2263 = vperm.slane %v2261, 0
          %v2265 = vadd.f32 %v2260, %v2263
          %vm2266 = vcmask 517120
          %2267 = vst.msk [vmem:[#allocation5] sm:$0x3] %vm2266, %v2265
        $region64: #{policy_net_forward.1} parent=51 // pred_fallthru
          _
        // Predicated region
        $region65: #{policy_net_forward.1} parent=51 // pred_check
          %p2268 = pneg %p216
        $region66: #{policy_net_forward.1} parent=51 // pred_check_branch
          %2270 = sbr.rel (%p2268) target = $region68
        $region67: #{policy_net_forward.1} parent=51 // pred_region
          %2272 = vsyncadd [#allocation6], 0
          %s2274 = sshll.u32 [#allocation5], 4
          %s2275 = int_to_ptr.vmem [resolvable:$true] %s2274
          %s2276 = sshll.u32 %s8, 4
          %s2277 = int_to_ptr.hbm [resolvable:$true] %s2276
          %2279 = dma.vmem_to_hbm [thread:$0]  %s2275, 32, %s2277, [#allocation6]
        $region68: #{policy_net_forward.1} parent=51 // pred_fallthru
          _
        // Predicated region
        $region69: #{policy_net_forward.1} parent=51 // pred_check
          %p2280 = pneg %p216
        $region70: #{policy_net_forward.1} parent=51 // pred_check_branch
          %2282 = sbr.rel (%p2280) target = $region72
        $region71: #{policy_net_forward.1} parent=51 // pred_region
          %2284 = dma.done [#allocation6], 32
        $region72: #{policy_net_forward.1} parent=51 // pred_fallthru
          _
      $region52: #{policy_net_forward.1} parent=5 // pred_fallthru
        _
      %p2285 = scmp.le.s32.totalorder 2, %s15
      // Predicated region
      $region73: #{policy_net_forward.1} parent=5 // pred_check
        %p2286 = pneg %p2285
      $region74: #{policy_net_forward.1} parent=5 // pred_check_branch
        %2288 = sbr.rel (%p2286) target = $region76
      $region75: #{policy_net_forward.1} parent=5 // pred_region
        %s2289 = ssub.s32 %s15, 2
      $region76: #{policy_net_forward.1} parent=5 // pred_fallthru
        _
    $region6: #{policy_net_forward.1} parent=1 // loop_footer
      %s19 = sadd.s32 1, %s15
    $region7: #{policy_net_forward.1} parent=1 // loop_footer_branch
      %14 = sbr.rel target = $region3
    $region8: #{policy_net_forward.1} parent=1 // loop_exit
      _
    %2290 = vsyncpa [#allocation6], 1
    %s2291 = scalar_lea.sflag [#allocation6], 1
    %2292 = vsyncpa %s2291, 1

</llo_original>
